<compile_context>
chip_gen: v7x
topology: tpu7x:2x2x1
jax: 0.10.0
libtpu: 0.0.40
codegen_flags: <defaults>
</compile_context>

<pallas_src>
import functools

import jax
import jax.numpy as jnp
from jax.experimental import pallas as pl
from jax.experimental.pallas import tpu as pltpu


def _round_up(x, m):
    return ((x + m - 1) // m) * m


def _largest_le(cands, limit):
    for c in cands:
        if c <= limit:
            return c
    return cands[-1]


# --------------------------------------------------------------------------
# Kernel 1: fused projection
#   self_proj  = (h * mask) @ W_h^T + b        (f32, bias folded here)
#   neigh_proj = (h * mask) @ W_c^T            (bf16 for the bf16 MXU aggregation)
#   (the 1/(1-p) dropout scale is pre-folded into the fused weight)
# --------------------------------------------------------------------------
def project_kernel(h_ref, mask_ref, wt_ref, b_ref, self_ref, neigh_ref, *, f_out_pad):
    h_d = h_ref[...] * mask_ref[...].astype(jnp.float32)       # int8 {0,1} mask
    hw = jnp.dot(h_d, wt_ref[...],
                 preferred_element_type=jnp.float32)            # [TM, 2*Fp], one MXU call
    self_ref[...] = hw[:, :f_out_pad] + b_ref[...]              # h_d @ W_h^T + b
    neigh_ref[...] = hw[:, f_out_pad:].astype(neigh_ref.dtype)  # h_d @ W_c^T  (bf16)


# --------------------------------------------------------------------------
# Kernel 2: tiled neighborhood aggregation + finalize
#   acc_i += adj_bf16[i, k] @ neigh_proj_bf16[k]   (K reduction, f32 VMEM accumulator)
#   out_i  = relu(self_proj[i] + inv_deg[i] * acc_i)
# --------------------------------------------------------------------------
def aggregate_kernel(adj_ref, neigh_ref, self_ref, inv_deg_ref, o_ref, acc_ref,
                     *, tile_k, neigh_resident):
    k = pl.program_id(1)

    @pl.when(k == 0)
    def _():
        acc_ref[...] = jnp.zeros_like(acc_ref)

    if neigh_resident:
        # whole neigh_proj lives in VMEM; slice the current K window in-kernel
        off = pl.multiple_of(k * tile_k, tile_k)
        neigh = neigh_ref[pl.ds(off, tile_k), :]
    else:
        neigh = neigh_ref[...]

    # native bf16 x bf16 MXU matmul, f32 accumulation
    acc_ref[...] += jnp.dot(adj_ref[...], neigh,
                            preferred_element_type=jnp.float32)

    @pl.when(k == pl.num_programs(1) - 1)
    def _():
        out = self_ref[...] + inv_deg_ref[...] * acc_ref[...]
        o_ref[...] = jnp.maximum(out, 0.0).astype(o_ref.dtype)


# --------------------------------------------------------------------------
# Wrapper
# --------------------------------------------------------------------------
def graphsage_forward(h, adj, w, b, *, key=None, p_drop=0.0):
    """h: [N, F_in] f32; adj: [N, N] with adj[dst, src] in {0,1};
    w: [F_out, 2*F_in] (torch Linear layout); b: [F_out]."""
    if key is None:
        key = jax.random.PRNGKey(0)
    return _graphsage_forward(h, adj, w, b, key, float(p_drop))


@functools.partial(jax.jit, static_argnums=(5,))
def _graphsage_forward(h, adj, w, b, key, p_drop):
    if p_drop >= 1.0:
        raise ValueError("p_drop must be < 1.0")
    n, f_in = h.shape
    f_out = w.shape[0]
    fp = _round_up(f_out, 128)          # lane-dense output width

    # ---- tile selection ----------------------------------------------------
    n0 = _round_up(n, 256)
    tile_k = _largest_le((2048, 1024, 512, 256), n0)            # adj columns
    tile_m = _largest_le((1024, 512, 256), max(n0 // 2, 256))   # dst rows; >=2 blocks when possible
    n_pad = _round_up(n, max(tile_m, tile_k))                   # tile_m | tile_k | n_pad

    f32 = jnp.float32
    h_p = jnp.zeros((n_pad, f_in), f32).at[:n, :].set(h.astype(f32))
    # adj stored bf16 directly (exact for 0/1); pad + cast fuse under jit
    adj_bf16 = jnp.zeros((n_pad, n_pad), jnp.bfloat16).at[:n, :n].set(adj.astype(jnp.bfloat16))

    # precomputed 1/deg (mean aggregator); zero in-degree -> aggregated half is 0
    deg = jnp.sum(adj.astype(f32), axis=1)
    inv_deg = jnp.zeros((n_pad, 1), f32).at[:n, 0].set(1.0 / jnp.maximum(deg, 1.0))

    # dropout: int8 keep-mask; 1/(1-p) scale folded into the fused weight
    if p_drop > 0.0:
        keep = jax.random.bernoulli(key, 1.0 - p_drop, (n_pad, f_in))
        mask = keep.astype(jnp.int8)
        keep_scale = 1.0 / (1.0 - p_drop)
    else:
        mask = jnp.ones((n_pad, f_in), jnp.int8)
        keep_scale = 1.0

    # fused weight [F_in, 2*Fp]: columns [0,Fp) = W_h^T (padded), [Fp,2Fp) = W_c^T
    w = w.astype(f32)
    w_h_t = w[:, :f_in].T
    w_c_t = w[:, f_in:].T
    wt_fused = jnp.zeros((f_in, 2 * fp), f32)
    wt_fused = wt_fused.at[:, :f_out].set(w_h_t).at[:, fp:fp + f_out].set(w_c_t)
    wt_fused = wt_fused * keep_scale
    bias_p = jnp.zeros((1, fp), f32).at[0, :f_out].set(b.astype(f32))

    # ---- projection kernel -------------------------------------------------
    n_row_blocks = n_pad // tile_m
    self_proj, neigh_proj = pl.pallas_call(
        functools.partial(project_kernel, f_out_pad=fp),
        out_shape=(jax.ShapeDtypeStruct((n_pad, fp), f32),
                   jax.ShapeDtypeStruct((n_pad, fp), jnp.bfloat16)),
        grid_spec=pltpu.PrefetchScalarGridSpec(
            num_scalar_prefetch=0,
            grid=(n_row_blocks,),
            in_specs=[
                pl.BlockSpec((tile_m, f_in), lambda i: (i, 0)),       # h
                pl.BlockSpec((tile_m, f_in), lambda i: (i, 0)),       # int8 mask
                pl.BlockSpec((f_in, 2 * fp), lambda i: (0, 0)),       # fused W
                pl.BlockSpec((1, fp), lambda i: (0, 0)),              # bias
            ],
            out_specs=[
                pl.BlockSpec((tile_m, fp), lambda i: (i, 0)),
                pl.BlockSpec((tile_m, fp), lambda i: (i, 0)),
            ],
        ),
        compiler_params=pltpu.CompilerParams(
            dimension_semantics=("parallel",)),
    )(h_p, mask, wt_fused, bias_p)

    # ---- aggregation kernel ------------------------------------------------
    n_k_blocks = n_pad // tile_k
    neigh_resident = (n_pad * fp * 2) <= (6 * 1024 * 1024)       # whole bf16 neigh_proj in VMEM
    if neigh_resident:
        neigh_spec = pl.BlockSpec((n_pad, fp), lambda i, k: (0, 0))
        neigh_rows = n_pad
    else:
        neigh_spec = pl.BlockSpec((tile_k, fp), lambda i, k: (k, 0))
        neigh_rows = tile_k

    # VMEM budget (double-buffered inputs counted twice); cap at v7x-safe 64 MiB
    vmem_bytes = (2 * tile_m * tile_k * 2          # adj bf16
                  + 2 * neigh_rows * fp * 2        # neigh bf16
                  + 2 * tile_m * fp * 4            # self f32
                  + 2 * tile_m * fp * 4            # out f32
                  + tile_m * fp * 4                # acc f32
                  + 2 * tile_m * 128 * 4           # inv_deg (lane-padded)
                  + (2 << 20))                     # slack
    vmem_limit = int(min(max(vmem_bytes, 16 << 20), 64 << 20))

    out_p = pl.pallas_call(
        functools.partial(aggregate_kernel, tile_k=tile_k,
                          neigh_resident=neigh_resident),
        out_shape=jax.ShapeDtypeStruct((n_pad, fp), f32),
        grid_spec=pltpu.PrefetchScalarGridSpec(
            num_scalar_prefetch=0,
            grid=(n_row_blocks, n_k_blocks),                     # (dst rows, src cols)
            in_specs=[
                pl.BlockSpec((tile_m, tile_k), lambda i, k: (i, k)),   # adj (bf16)
                neigh_spec,                                            # neigh_proj (bf16)
                pl.BlockSpec((tile_m, fp), lambda i, k: (i, 0)),       # self_proj (+bias)
                pl.BlockSpec((tile_m, 1), lambda i, k: (i, 0)),        # inv_deg
            ],
            out_specs=pl.BlockSpec((tile_m, fp), lambda i, k: (i, 0)),
            scratch_shapes=[pltpu.VMEM((tile_m, fp), jnp.float32)],
        ),
        compiler_params=pltpu.CompilerParams(
            dimension_semantics=("parallel", "arbitrary"),
            vmem_limit_bytes=vmem_limit),
    )(adj_bf16, neigh_proj, self_proj, inv_deg)

    return out_p[:n, :f_out]


if __name__ == "__main__":
    N, F_IN, F_OUT = 300, 32, 32
    key = jax.random.PRNGKey(0)
    k1, k2, k3, k4, k5 = jax.random.split(key, 5)

    # node features
    h = jax.random.normal(k1, (N, F_IN), dtype=jnp.float32)

    # random directed graph + ring edges so every node has >= 1 in-neighbor
    adj_rand = (jax.random.uniform(k2, (N, N)) < 0.05).astype(jnp.float32)
    ring = jnp.roll(jnp.eye(N, dtype=jnp.float32), 1, axis=1)
    adj = jnp.clip(adj_rand + ring, 0.0, 1.0)

    # Bundler linear: xavier_uniform(gain=sqrt(2)) on W [F_out, 2*F_in],
    # torch default uniform(+-1/sqrt(fan_in)) on bias
    gain = 2.0 ** 0.5
    limit = gain * (6.0 / (2 * F_IN + F_OUT)) ** 0.5
    w = jax.random.uniform(k3, (F_OUT, 2 * F_IN), minval=-limit, maxval=limit,
                           dtype=jnp.float32)
    b_lim = 1.0 / (2 * F_IN) ** 0.5
    b = jax.random.uniform(k4, (F_OUT,), minval=-b_lim, maxval=b_lim,
                           dtype=jnp.float32)

    # correctness check against a pure-JAX f32 reference with dropout disabled.
    # neigh_proj travels as bf16 so use a ~1e-2 relative tolerance.
    out0 = graphsage_forward(h, adj, w, b, p_drop=0.0)
    jax.block_until_ready(out0)
    deg = jnp.maximum(jnp.sum(adj, axis=1, keepdims=True), 1.0)
    c = (adj @ h) / deg
    ref = jax.nn.relu(jnp.concatenate([h, c], axis=1) @ w.T + b)
    assert out0.shape == (N, F_OUT) and out0.dtype == jnp.float32
    err = float(jnp.max(jnp.abs(out0 - ref)))
    ref_scale = max(1.0, float(jnp.max(jnp.abs(ref))))
    assert err <= 1e-2 * ref_scale, f"mismatch vs reference: abs={err}, refmax={ref_scale}"

    # training-mode forward with dropout
    out1 = graphsage_forward(h, adj, w, b, p_drop=0.1, key=k5)
    jax.block_until_ready(out1)
    assert out1.shape == (N, F_OUT)
    assert bool(jnp.all(jnp.isfinite(out1)))

    print("KERNEL_OK")
</pallas_src>

<mosaic_0001>
module attributes {stable_mosaic.version = 11 : i64} {
  func.func @project_kernel(%arg0: i32, %arg1: memref<256x32xf32, #tpu.memory_space<vmem>>, %arg2: memref<256x32xi8, #tpu.memory_space<vmem>>, %arg3: memref<32x256xf32, #tpu.memory_space<vmem>>, %arg4: memref<1x128xf32, #tpu.memory_space<vmem>>, %arg5: memref<256x128xf32, #tpu.memory_space<vmem>>, %arg6: memref<256x128xbf16, #tpu.memory_space<vmem>>) attributes {dimension_semantics = [#tpu.dimension_semantics<parallel>], iteration_bounds = array<i64: 2>, scalar_prefetch = 0 : i64, scratch_operands = 0 : i64, tpu.core_type = #tpu.core_type<tc>, window_params = [{transform_indices = @transform_0, window_bounds = array<i64: 256, 32>}, {transform_indices = @transform_1, window_bounds = array<i64: 256, 32>}, {pipeline_mode = #tpu.pipeline_mode<synchronous>, transform_indices = @transform_2, window_bounds = array<i64: 32, 256>}, {pipeline_mode = #tpu.pipeline_mode<synchronous>, transform_indices = @transform_3, window_bounds = array<i64: 1, 128>}, {transform_indices = @transform_4, window_bounds = array<i64: 256, 128>}, {transform_indices = @transform_5, window_bounds = array<i64: 256, 128>}]} {
    %c0 = arith.constant 0 : index
    %c0_0 = arith.constant 0 : index
    %0 = vector.load %arg1[%c0, %c0_0] : memref<256x32xf32, #tpu.memory_space<vmem>>, vector<256x32xf32>
    %c0_1 = arith.constant 0 : index
    %c0_2 = arith.constant 0 : index
    %1 = vector.load %arg2[%c0_1, %c0_2] : memref<256x32xi8, #tpu.memory_space<vmem>>, vector<256x32xi8>
    %2 = arith.sitofp %1 : vector<256x32xi8> to vector<256x32xf32>
    %3 = arith.mulf %0, %2 : vector<256x32xf32>
    %c0_3 = arith.constant 0 : index
    %c0_4 = arith.constant 0 : index
    %4 = vector.load %arg3[%c0_3, %c0_4] : memref<32x256xf32, #tpu.memory_space<vmem>>, vector<32x256xf32>
    %cst = arith.constant dense<0.000000e+00> : vector<256x256xf32>
    %5 = tpu.matmul %3, %4, %cst {dimension_numbers = #tpu.dot_dimension_numbers<[1], [0], [0], [1], [0, 0, 1, 1], [], []>} : vector<256x32xf32>, vector<32x256xf32>, vector<256x256xf32> -> vector<256x256xf32>
    %6 = vector.extract_strided_slice %5 {offsets = [0, 0], sizes = [256, 128], strides = [1, 1]} : vector<256x256xf32> to vector<256x128xf32>
    %c0_5 = arith.constant 0 : index
    %c0_6 = arith.constant 0 : index
    %7 = vector.load %arg4[%c0_5, %c0_6] : memref<1x128xf32, #tpu.memory_space<vmem>>, vector<1x128xf32>
    %8 = vector.broadcast %7 : vector<1x128xf32> to vector<256x128xf32>
    %9 = arith.addf %6, %8 : vector<256x128xf32>
    %c0_7 = arith.constant 0 : index
    %c0_8 = arith.constant 0 : index
    %10 = vector.load %arg5[%c0_7, %c0_8] : memref<256x128xf32, #tpu.memory_space<vmem>>, vector<256x128xf32>
    tpu.vector_store %arg5[%c0_7, %c0_8], %9 {strides = array<i32>} : memref<256x128xf32, #tpu.memory_space<vmem>>, vector<256x128xf32>,
    %11 = vector.extract_strided_slice %5 {offsets = [0, 128], sizes = [256, 128], strides = [1, 1]} : vector<256x256xf32> to vector<256x128xf32>
    %12 = arith.truncf %11 : vector<256x128xf32> to vector<256x128xbf16>
    %c0_9 = arith.constant 0 : index
    %c0_10 = arith.constant 0 : index
    %13 = vector.load %arg6[%c0_9, %c0_10] : memref<256x128xbf16, #tpu.memory_space<vmem>>, vector<256x128xbf16>
    tpu.vector_store %arg6[%c0_9, %c0_10], %12 {strides = array<i32>} : memref<256x128xbf16, #tpu.memory_space<vmem>>, vector<256x128xbf16>,
    return
  }
  func.func @transform_0(%arg0: i32) -> (i32, i32) {
    %c0_i32 = arith.constant 0 : i32
    %c0_i32_0 = arith.constant 0 : i32
    return %arg0, %c0_i32 : i32, i32
  }
  func.func @transform_1(%arg0: i32) -> (i32, i32) {
    %c0_i32 = arith.constant 0 : i32
    %c0_i32_0 = arith.constant 0 : i32
    return %arg0, %c0_i32 : i32, i32
  }
  func.func @transform_2(%arg0: i32) -> (i32, i32) {
    %c0_i32 = arith.constant 0 : i32
    %c0_i32_0 = arith.constant 0 : i32
    %c0_i32_1 = arith.constant 0 : i32
    return %c0_i32, %c0_i32_0 : i32, i32
  }
  func.func @transform_3(%arg0: i32) -> (i32, i32) {
    %c0_i32 = arith.constant 0 : i32
    %c0_i32_0 = arith.constant 0 : i32
    %c0_i32_1 = arith.constant 0 : i32
    return %c0_i32, %c0_i32_0 : i32, i32
  }
  func.func @transform_4(%arg0: i32) -> (i32, i32) {
    %c0_i32 = arith.constant 0 : i32
    %c0_i32_0 = arith.constant 0 : i32
    return %arg0, %c0_i32 : i32, i32
  }
  func.func @transform_5(%arg0: i32) -> (i32, i32) {
    %c0_i32 = arith.constant 0 : i32
    %c0_i32_0 = arith.constant 0 : i32
    return %arg0, %c0_i32 : i32, i32
  }
}

module attributes {stable_mosaic.version = 11 : i64} {
  func.func @aggregate_kernel(%arg0: i32, %arg1: i32, %arg2: memref<256x512xbf16, #tpu.memory_space<vmem>>, %arg3: memref<512x128xbf16, #tpu.memory_space<vmem>>, %arg4: memref<256x128xf32, #tpu.memory_space<vmem>>, %arg5: memref<256x1xf32, #tpu.memory_space<vmem>>, %arg6: memref<256x128xf32, #tpu.memory_space<vmem>>, %arg7: memref<256x128xf32, #tpu.memory_space<vmem>>) attributes {dimension_semantics = [#tpu.dimension_semantics<parallel>, #tpu.dimension_semantics<arbitrary>], iteration_bounds = array<i64: 2, 1>, scalar_prefetch = 0 : i64, scratch_operands = 1 : i64, tpu.core_type = #tpu.core_type<tc>, window_params = [{transform_indices = @transform_0, window_bounds = array<i64: 256, 512>}, {pipeline_mode = #tpu.pipeline_mode<synchronous>, transform_indices = @transform_1, window_bounds = array<i64: 512, 128>}, {transform_indices = @transform_2, window_bounds = array<i64: 256, 128>}, {transform_indices = @transform_3, window_bounds = array<i64: 256, 1>}, {transform_indices = @transform_4, window_bounds = array<i64: 256, 128>}]} {
    %c0_i32 = arith.constant 0 : i32
    %0 = arith.cmpi eq, %arg1, %c0_i32 : i32
    %1 = arith.extui %0 : i1 to i32
    %c0_i32_0 = arith.constant 0 : i32
    %2 = arith.cmpi ne, %1, %c0_i32_0 : i32
    scf.if %2 {
      %cst_9 = arith.constant 0.000000e+00 : f32
      %15 = vector.broadcast %cst_9 : f32 to vector<256x128xf32>
      %c0_10 = arith.constant 0 : index
      %c0_11 = arith.constant 0 : index
      %16 = vector.load %arg7[%c0_10, %c0_11] : memref<256x128xf32, #tpu.memory_space<vmem>>, vector<256x128xf32>
      tpu.vector_store %arg7[%c0_10, %c0_11], %15 {strides = array<i32>} : memref<256x128xf32, #tpu.memory_space<vmem>>, vector<256x128xf32>,
    } else {
    }
    %c512_i32 = arith.constant 512 : i32
    %3 = arith.muli %arg1, %c512_i32 : i32
    %4 = tpu.assume_multiple %3, 512 : i32
    %5 = arith.index_cast %4 : i32 to index
    %c0 = arith.constant 0 : index
    %6 = vector.load %arg3[%5, %c0] : memref<512x128xbf16, #tpu.memory_space<vmem>>, vector<512x128xbf16>
    %c0_1 = arith.constant 0 : index
    %c0_2 = arith.constant 0 : index
    %7 = vector.load %arg7[%c0_1, %c0_2] : memref<256x128xf32, #tpu.memory_space<vmem>>, vector<256x128xf32>
    %c0_3 = arith.constant 0 : index
    %c0_4 = arith.constant 0 : index
    %8 = vector.load %arg2[%c0_3, %c0_4] : memref<256x512xbf16, #tpu.memory_space<vmem>>, vector<256x512xbf16>
    %cst = arith.constant dense<0.000000e+00> : vector<256x128xf32>
    %9 = tpu.matmul %8, %6, %cst {dimension_numbers = #tpu.dot_dimension_numbers<[1], [0], [0], [1], [0, 0, 1, 1], [], []>} : vector<256x512xbf16>, vector<512x128xbf16>, vector<256x128xf32> -> vector<256x128xf32>
    %10 = arith.addf %7, %9 : vector<256x128xf32>
    %c0_5 = arith.constant 0 : index
    %c0_6 = arith.constant 0 : index
    %11 = vector.load %arg7[%c0_5, %c0_6] : memref<256x128xf32, #tpu.memory_space<vmem>>, vector<256x128xf32>
    tpu.vector_store %arg7[%c0_5, %c0_6], %10 {strides = array<i32>} : memref<256x128xf32, #tpu.memory_space<vmem>>, vector<256x128xf32>,
    %c0_i32_7 = arith.constant 0 : i32
    %12 = arith.cmpi eq, %arg1, %c0_i32_7 : i32
    %13 = arith.extui %12 : i1 to i32
    %c0_i32_8 = arith.constant 0 : i32
    %14 = arith.cmpi ne, %13, %c0_i32_8 : i32
    scf.if %14 {
      %c0_9 = arith.constant 0 : index
      %c0_10 = arith.constant 0 : index
      %15 = vector.load %arg4[%c0_9, %c0_10] : memref<256x128xf32, #tpu.memory_space<vmem>>, vector<256x128xf32>
      %c0_11 = arith.constant 0 : index
      %c0_12 = arith.constant 0 : index
      %16 = vector.load %arg5[%c0_11, %c0_12] : memref<256x1xf32, #tpu.memory_space<vmem>>, vector<256x1xf32>
      %c0_13 = arith.constant 0 : index
      %c0_14 = arith.constant 0 : index
      %17 = vector.load %arg7[%c0_13, %c0_14] : memref<256x128xf32, #tpu.memory_space<vmem>>, vector<256x128xf32>
      %18 = vector.broadcast %16 : vector<256x1xf32> to vector<256x128xf32>
      %19 = arith.mulf %18, %17 : vector<256x128xf32>
      %20 = arith.addf %15, %19 : vector<256x128xf32>
      %cst_15 = arith.constant 0.000000e+00 : f32
      %21 = vector.broadcast %cst_15 : f32 to vector<256x128xf32>
      %22 = arith.maximumf %20, %21 : vector<256x128xf32>
      %c0_16 = arith.constant 0 : index
      %c0_17 = arith.constant 0 : index
      %23 = vector.load %arg6[%c0_16, %c0_17] : memref<256x128xf32, #tpu.memory_space<vmem>>, vector<256x128xf32>
      tpu.vector_store %arg6[%c0_16, %c0_17], %22 {strides = array<i32>} : memref<256x128xf32, #tpu.memory_space<vmem>>, vector<256x128xf32>,
    } else {
    }
    return
  }
  func.func @transform_0(%arg0: i32, %arg1: i32) -> (i32, i32) {
    %c0_i32 = arith.constant 0 : i32
    return %arg0, %arg1 : i32, i32
  }
  func.func @transform_1(%arg0: i32, %arg1: i32) -> (i32, i32) {
    %c0_i32 = arith.constant 0 : i32
    %c0_i32_0 = arith.constant 0 : i32
    %c0_i32_1 = arith.constant 0 : i32
    return %c0_i32, %c0_i32_0 : i32, i32
  }
  func.func @transform_2(%arg0: i32, %arg1: i32) -> (i32, i32) {
    %c0_i32 = arith.constant 0 : i32
    %c0_i32_0 = arith.constant 0 : i32
    return %arg0, %c0_i32 : i32, i32
  }
  func.func @transform_3(%arg0: i32, %arg1: i32) -> (i32, i32) {
    %c0_i32 = arith.constant 0 : i32
    %c0_i32_0 = arith.constant 0 : i32
    return %arg0, %c0_i32 : i32, i32
  }
  func.func @transform_4(%arg0: i32, %arg1: i32) -> (i32, i32) {
    %c0_i32 = arith.constant 0 : i32
    %c0_i32_0 = arith.constant 0 : i32
    return %arg0, %c0_i32 : i32, i32
  }
}

</mosaic_0001>

<llo_original>
// kernel: _graphsage_forward.2
$region0: #{_graphsage_forward.2}
  #allocation0 [shape = 'u32[]', space=smem, size = 0x4, offset = 0x4, fixed_abs, tag = 'smem constant byte address 0x4 - core index']
  #allocation1 [shape = 'u32[144,128]{1,0:T(1,128)}', space=vmem, size = 0x12000, scoped, tag = 'internal scratch']
  %s0 = inlined_call_operand.vmem [shape: f32[512,32], index: 0, kind: input, shape index: {}]
  %s1 = inlined_call_operand.vmem [shape: s8[512,32], index: 1, kind: input, shape index: {}]
  %s2 = inlined_call_operand.vmem [shape: f32[32,256], index: 2, kind: input, shape index: {}]
  %s3 = inlined_call_operand.vmem [shape: f32[1,128], index: 3, kind: input, shape index: {}]
  %s4 = inlined_call_operand.vmem [shape: f32[512,128], index: 4, kind: output, shape index: {0}]
  %s5 = inlined_call_operand.vmem [shape: bf16[512,128], index: 5, kind: output, shape index: {1}]
  %6 = xla_tuple %s4, %s5
  %s7 = sld [smem:[#allocation0]]
  $region57: #{_graphsage_forward.2} parent=0
    _
  %s9 = ssub.s32 1, %s7
  %s10 = scalar_select 0, %s9, %s7
  loop: start=0, step=1, limit=4
  $region2: #{_graphsage_forward.2} parent=0 // loop_pre_header
    _
  $region3: #{_graphsage_forward.2} parent=0 // loop_header
    %s12 = sphi 0, %s16
    %p13 = scmp.ge.s32.totalorder %s12, 4
    %s22 = sphi 0, %s24
    %s25 = sphi 0, %s22
    %s26 = sphi 0, %s25
    %s42 = sphi 0, %s26
    %s48 = sphi 0, %s50
    %s51 = sphi 0, %s48
    %s52 = sphi 0, %s51
    %s68 = sphi 0, %s52
    %s72 = sphi 0, %s72
    %s74 = sphi 0, %s72
    %s75 = sphi 0, %s74
    %s89 = sphi 0, %s75
    %s93 = sphi 0, %s93
    %s95 = sphi 0, %s93
    %s96 = sphi 0, %s95
    %s110 = sphi 0, %s96
    %s116 = sphi 0, %s118
    %s119 = sphi 0, %s116
    %s120 = sphi 0, %s119
    %s136 = sphi 0, %s120
    %s142 = sphi 0, %s144
    %s145 = sphi 0, %s142
    %s146 = sphi 0, %s145
    %s162 = sphi 0, %s146
  $region4: #{_graphsage_forward.2} parent=0 // loop_header_branch
    %15 = sbr.rel (%p13) target = $region8
  $region5: #{_graphsage_forward.2} parent=0 // loop_body
    %s17 = ssub.s32 %s12, 1
    %s18 = ssub.s32 %s12, 2
    %s19 = sadd.s32 %s12, 1
    %s20 = ssub.s32 %s12, %s19
    %p21 = scmp.eq.s32.totalorder %s20, 0
    %s23 = sadd.s32 %s22, 1
    %s24 = scalar_select %p21, %s22, %s23
    %p27 = pneg %p21
    %p28 = scmp.eq.s32.totalorder %s12, 1
    %p29 = por %p27, %p28
    %p30 = scmp.ne.s32.totalorder %s22, %s25
    %p31 = scmp.eq.s32.totalorder %s12, 0
    %p32 = por %p30, %p31
    %p33 = scmp.ne.s32.totalorder %s22, %s25
    %p34 = scmp.eq.s32.totalorder %s17, 1
    %p35 = por %p33, %p34
    %p36 = scmp.ne.s32.totalorder %s25, %s26
    %p37 = scmp.eq.s32.totalorder %s17, 0
    %p38 = por %p36, %p37
    %p39 = scmp.ne.s32.totalorder %s25, %s26
    %p40 = scmp.eq.s32.totalorder %s18, 1
    %p41 = por %p39, %p40
    %p43 = scmp.ne.s32.totalorder %s26, %s42
    %p44 = scmp.eq.s32.totalorder %s18, 0
    %p45 = por %p43, %p44
    %s46 = ssub.s32 %s12, %s19
    %p47 = scmp.eq.s32.totalorder %s46, 0
    %s49 = sadd.s32 %s48, 1
    %s50 = scalar_select %p47, %s48, %s49
    %p53 = pneg %p47
    %p54 = scmp.eq.s32.totalorder %s12, 1
    %p55 = por %p53, %p54
    %p56 = scmp.ne.s32.totalorder %s48, %s51
    %p57 = scmp.eq.s32.totalorder %s12, 0
    %p58 = por %p56, %p57
    %p59 = scmp.ne.s32.totalorder %s48, %s51
    %p60 = scmp.eq.s32.totalorder %s17, 1
    %p61 = por %p59, %p60
    %p62 = scmp.ne.s32.totalorder %s51, %s52
    %p63 = scmp.eq.s32.totalorder %s17, 0
    %p64 = por %p62, %p63
    %p65 = scmp.ne.s32.totalorder %s51, %s52
    %p66 = scmp.eq.s32.totalorder %s18, 1
    %p67 = por %p65, %p66
    %p69 = scmp.ne.s32.totalorder %s52, %s68
    %p70 = scmp.eq.s32.totalorder %s18, 0
    %p71 = por %p69, %p70
    %s73 = sadd.s32 %s72, 1
    %p76 = scmp.eq.s32.totalorder %s12, 1
    %p77 = scmp.ne.s32.totalorder %s72, %s74
    %p78 = scmp.eq.s32.totalorder %s12, 0
    %p79 = por %p77, %p78
    %p80 = scmp.ne.s32.totalorder %s72, %s74
    %p81 = scmp.eq.s32.totalorder %s17, 1
    %p82 = por %p80, %p81
    %p83 = scmp.ne.s32.totalorder %s74, %s75
    %p84 = scmp.eq.s32.totalorder %s17, 0
    %p85 = por %p83, %p84
    %p86 = scmp.ne.s32.totalorder %s74, %s75
    %p87 = scmp.eq.s32.totalorder %s18, 1
    %p88 = por %p86, %p87
    %p90 = scmp.ne.s32.totalorder %s75, %s89
    %p91 = scmp.eq.s32.totalorder %s18, 0
    %p92 = por %p90, %p91
    %s94 = sadd.s32 %s93, 1
    %p97 = scmp.eq.s32.totalorder %s12, 1
    %p98 = scmp.ne.s32.totalorder %s93, %s95
    %p99 = scmp.eq.s32.totalorder %s12, 0
    %p100 = por %p98, %p99
    %p101 = scmp.ne.s32.totalorder %s93, %s95
    %p102 = scmp.eq.s32.totalorder %s17, 1
    %p103 = por %p101, %p102
    %p104 = scmp.ne.s32.totalorder %s95, %s96
    %p105 = scmp.eq.s32.totalorder %s17, 0
    %p106 = por %p104, %p105
    %p107 = scmp.ne.s32.totalorder %s95, %s96
    %p108 = scmp.eq.s32.totalorder %s18, 1
    %p109 = por %p107, %p108
    %p111 = scmp.ne.s32.totalorder %s96, %s110
    %p112 = scmp.eq.s32.totalorder %s18, 0
    %p113 = por %p111, %p112
    %s114 = ssub.s32 %s12, %s19
    %p115 = scmp.eq.s32.totalorder %s114, 0
    %s117 = sadd.s32 %s116, 1
    %s118 = scalar_select %p115, %s116, %s117
    %p121 = pneg %p115
    %p122 = scmp.eq.s32.totalorder %s12, 1
    %p123 = por %p121, %p122
    %p124 = scmp.ne.s32.totalorder %s116, %s119
    %p125 = scmp.eq.s32.totalorder %s12, 0
    %p126 = por %p124, %p125
    %p127 = scmp.ne.s32.totalorder %s116, %s119
    %p128 = scmp.eq.s32.totalorder %s17, 1
    %p129 = por %p127, %p128
    %p130 = scmp.ne.s32.totalorder %s119, %s120
    %p131 = scmp.eq.s32.totalorder %s17, 0
    %p132 = por %p130, %p131
    %p133 = scmp.ne.s32.totalorder %s119, %s120
    %p134 = scmp.eq.s32.totalorder %s18, 1
    %p135 = por %p133, %p134
    %p137 = scmp.ne.s32.totalorder %s120, %s136
    %p138 = scmp.eq.s32.totalorder %s18, 0
    %p139 = por %p137, %p138
    %s140 = ssub.s32 %s12, %s19
    %p141 = scmp.eq.s32.totalorder %s140, 0
    %s143 = sadd.s32 %s142, 1
    %s144 = scalar_select %p141, %s142, %s143
    %p147 = pneg %p141
    %p148 = scmp.eq.s32.totalorder %s12, 1
    %p149 = por %p147, %p148
    %p150 = scmp.ne.s32.totalorder %s142, %s145
    %p151 = scmp.eq.s32.totalorder %s12, 0
    %p152 = por %p150, %p151
    %p153 = scmp.ne.s32.totalorder %s142, %s145
    %p154 = scmp.eq.s32.totalorder %s17, 1
    %p155 = por %p153, %p154
    %p156 = scmp.ne.s32.totalorder %s145, %s146
    %p157 = scmp.eq.s32.totalorder %s17, 0
    %p158 = por %p156, %p157
    %p159 = scmp.ne.s32.totalorder %s145, %s146
    %p160 = scmp.eq.s32.totalorder %s18, 1
    %p161 = por %p159, %p160
    %p163 = scmp.ne.s32.totalorder %s146, %s162
    %p164 = scmp.eq.s32.totalorder %s18, 0
    %p165 = por %p163, %p164
    %p166 = scmp.le.s32.totalorder 1, %s12
    %p167 = scmp.lt.s32.totalorder %s12, 3
    %p168 = pnand %p166, %p167
    %p169 = pneg %p168
    // Predicated region
    $region9: #{_graphsage_forward.2} parent=5 // pred_check
      _
    $region10: #{_graphsage_forward.2} parent=5 // pred_check_branch
      %171 = sbr.rel (%p168) target = $region12
    $region11: #{_graphsage_forward.2} parent=5 // pred_region
      %s172 = ssub.s32 %s12, 1
      // Predicated region
      $region13: #{_graphsage_forward.2} parent=11 // pred_check
        %p173 = pneg %p85
      $region14: #{_graphsage_forward.2} parent=11 // pred_check_branch
        %175 = sbr.rel (%p173) target = $region16
      $region15: #{_graphsage_forward.2} parent=11 // pred_region
        _
      $region16: #{_graphsage_forward.2} parent=11 // pred_fallthru
        _
      // Predicated region
      $region17: #{_graphsage_forward.2} parent=11 // pred_check
        %p176 = pneg %p106
      $region18: #{_graphsage_forward.2} parent=11 // pred_check_branch
        %178 = sbr.rel (%p176) target = $region20
      $region19: #{_graphsage_forward.2} parent=11 // pred_region
        _
      $region20: #{_graphsage_forward.2} parent=11 // pred_fallthru
        _
    $region12: #{_graphsage_forward.2} parent=5 // pred_fallthru
      _
    %p179 = scmp.lt.s32.totalorder %s12, 2
    // Predicated region
    $region21: #{_graphsage_forward.2} parent=5 // pred_check
      %p180 = pneg %p179
    $region22: #{_graphsage_forward.2} parent=5 // pred_check_branch
      %182 = sbr.rel (%p180) target = $region24
    $region23: #{_graphsage_forward.2} parent=5 // pred_region
      // Predicated region
      $region25: #{_graphsage_forward.2} parent=23 // pred_check
        %p183 = pneg %p32
      $region26: #{_graphsage_forward.2} parent=23 // pred_check_branch
        %185 = sbr.rel (%p183) target = $region28
      $region27: #{_graphsage_forward.2} parent=23 // pred_region
        %s186 = smul.u32 32, %s12
        %p187 = scmp.lt.s32.totalorder %s186, 63
        %s188 = scalar_select %p187, %s186, 63
        %s189 = smul.addr %s188, 8
        %s190 = scalar_lea.vmem %s0, %s189
        %s191 = smul.u32 32, %s12
      $region28: #{_graphsage_forward.2} parent=23 // pred_fallthru
        _
      // Predicated region
      $region29: #{_graphsage_forward.2} parent=23 // pred_check
        %p192 = pneg %p58
      $region30: #{_graphsage_forward.2} parent=23 // pred_check_branch
        %194 = sbr.rel (%p192) target = $region32
      $region31: #{_graphsage_forward.2} parent=23 // pred_region
        %s195 = smul.u32 8, %s12
        %p196 = scmp.lt.s32.totalorder %s195, 15
        %s197 = scalar_select %p196, %s195, 15
        %s198 = smul.addr %s197, 8
        %s199 = scalar_lea.vmem %s1, %s198
        %s200 = smul.u32 8, %s12
      $region32: #{_graphsage_forward.2} parent=23 // pred_fallthru
        _
    $region24: #{_graphsage_forward.2} parent=5 // pred_fallthru
      _
    %p201 = scmp.le.s32.totalorder 1, %s12
    %p202 = scmp.lt.s32.totalorder %s12, 3
    %p203 = pnand %p201, %p202
    %p204 = pneg %p203
    // Predicated region
    $region33: #{_graphsage_forward.2} parent=5 // pred_check
      _
    $region34: #{_graphsage_forward.2} parent=5 // pred_check_branch
      %206 = sbr.rel (%p203) target = $region36
    $region35: #{_graphsage_forward.2} parent=5 // pred_region
      %s207 = ssub.s32 %s12, 1
      %s208 = smul.u32 32, %s17
      %p209 = scmp.lt.s32.totalorder %s208, 63
      %s210 = scalar_select %p209, %s208, 63
      %s211 = smul.addr %s210, 8
      %s212 = scalar_lea.vmem %s0, %s211
      %p213 = pneg %p38
      %p214 = pneg %p35
      %s215 = smul.u32 8, %s17
      %p216 = scmp.lt.s32.totalorder %s215, 15
      %s217 = scalar_select %p216, %s215, 15
      %s218 = smul.addr %s217, 8
      %s219 = scalar_lea.vmem %s1, %s218
      %p220 = pneg %p64
      %p221 = pneg %p61
      %p222 = pneg %p85
      %p223 = pneg %p82
      %p224 = pneg %p106
      %p225 = pneg %p103
      %p226 = pneg %p132
      %p227 = pneg %p129
      %s228 = smul.u32 32, %s17
      %p229 = scmp.lt.s32.totalorder %s228, 63
      %s230 = scalar_select %p229, %s228, 63
      %s231 = smul.addr %s230, 8
      %s232 = scalar_lea.vmem %s4, %s231
      %p233 = pneg %p158
      %p234 = pneg %p155
      %s235 = smul.u32 32, %s17
      %p236 = scmp.lt.s32.totalorder %s235, 63
      %s237 = scalar_select %p236, %s235, 63
      %s238 = smul.addr %s237, 4
      %s239 = scalar_lea.vmem %s5, %s238
      %s240 = smul.u32 32, %s17
      %p241 = scmp.lt.s32.totalorder %s240, 63
      %s242 = scalar_select %p241, %s240, 63
      %s243 = smul.addr %s242, 8
      %s244 = scalar_lea.vmem %s0, %s243
      %s245 = smul.u32 32, %s17
      %s246 = smul.u32 8, %s17
      %p247 = scmp.lt.s32.totalorder %s246, 15
      %s248 = scalar_select %p247, %s246, 15
      %s249 = smul.addr %s248, 8
      %s250 = scalar_lea.vmem %s1, %s249
      %s251 = smul.u32 8, %s17
      %s252 = smul.u32 32, %s17
      %p253 = scmp.lt.s32.totalorder %s252, 63
      %s254 = scalar_select %p253, %s252, 63
      %s255 = smul.addr %s254, 8
      %s256 = scalar_lea.vmem %s4, %s255
      %s257 = smul.u32 32, %s17
      %s258 = smul.u32 32, %s17
      %p259 = scmp.lt.s32.totalorder %s258, 63
      %s260 = scalar_select %p259, %s258, 63
      %s261 = smul.addr %s260, 4
      %s262 = scalar_lea.vmem %s5, %s261
      %s263 = smul.u32 32, %s17
      %v264 = vld [vmem:[%s244] sm:$0xff]
      %v265 = vld [vmem:[%s244 + $0x8] sm:$0xff]
      %v266 = vld [vmem:[%s244 + $0x10] sm:$0xff]
      %v267 = vld [vmem:[%s244 + $0x18] sm:$0xff]
      %v268 = vld [vmem:[%s244 + $0x20] sm:$0xff]
      %v269 = vld [vmem:[%s244 + $0x28] sm:$0xff]
      %v270 = vld [vmem:[%s244 + $0x30] sm:$0xff]
      %v271 = vld [vmem:[%s244 + $0x38] sm:$0xff]
      %v272 = vld [vmem:[%s244 + $0x40] sm:$0xff]
      %v273 = vld [vmem:[%s244 + $0x48] sm:$0xff]
      %v274 = vld [vmem:[%s244 + $0x50] sm:$0xff]
      %v275 = vld [vmem:[%s244 + $0x58] sm:$0xff]
      %v276 = vld [vmem:[%s244 + $0x60] sm:$0xff]
      %v277 = vld [vmem:[%s244 + $0x68] sm:$0xff]
      %v278 = vld [vmem:[%s244 + $0x70] sm:$0xff]
      %v279 = vld [vmem:[%s244 + $0x78] sm:$0xff]
      %v280 = vld [vmem:[%s244 + $0x80] sm:$0xff]
      %v281 = vld [vmem:[%s244 + $0x88] sm:$0xff]
      %v282 = vld [vmem:[%s244 + $0x90] sm:$0xff]
      %v283 = vld [vmem:[%s244 + $0x98] sm:$0xff]
      %v284 = vld [vmem:[%s244 + $0xa0] sm:$0xff]
      %v285 = vld [vmem:[%s244 + $0xa8] sm:$0xff]
      %v286 = vld [vmem:[%s244 + $0xb0] sm:$0xff]
      %v287 = vld [vmem:[%s244 + $0xb8] sm:$0xff]
      %v288 = vld [vmem:[%s244 + $0xc0] sm:$0xff]
      %v289 = vld [vmem:[%s244 + $0xc8] sm:$0xff]
      %v290 = vld [vmem:[%s244 + $0xd0] sm:$0xff]
      %v291 = vld [vmem:[%s244 + $0xd8] sm:$0xff]
      %v292 = vld [vmem:[%s244 + $0xe0] sm:$0xff]
      %v293 = vld [vmem:[%s244 + $0xe8] sm:$0xff]
      %v294 = vld [vmem:[%s244 + $0xf0] sm:$0xff]
      %v295 = vld [vmem:[%s244 + $0xf8] sm:$0xff]
      %v296 = vld [vmem:[%s250] sm:$0xff]
      %v297 = vld [vmem:[%s250 + $0x8] sm:$0xff]
      %v298 = vld [vmem:[%s250 + $0x10] sm:$0xff]
      %v299 = vld [vmem:[%s250 + $0x18] sm:$0xff]
      %v300 = vld [vmem:[%s250 + $0x20] sm:$0xff]
      %v301 = vld [vmem:[%s250 + $0x28] sm:$0xff]
      %v302 = vld [vmem:[%s250 + $0x30] sm:$0xff]
      %v303 = vld [vmem:[%s250 + $0x38] sm:$0xff]
      %v304 = vunpack.c.0.s8 %v296
      %v305 = vunpack.c.1.s8 %v296
      %v306 = vunpack.c.2.s8 %v296
      %v307 = vunpack.c.3.s8 %v296
      %v308 = vunpack.c.0.s8 %v297
      %v309 = vunpack.c.1.s8 %v297
      %v310 = vunpack.c.2.s8 %v297
      %v311 = vunpack.c.3.s8 %v297
      %v312 = vunpack.c.0.s8 %v298
      %v313 = vunpack.c.1.s8 %v298
      %v314 = vunpack.c.2.s8 %v298
      %v315 = vunpack.c.3.s8 %v298
      %v316 = vunpack.c.0.s8 %v299
      %v317 = vunpack.c.1.s8 %v299
      %v318 = vunpack.c.2.s8 %v299
      %v319 = vunpack.c.3.s8 %v299
      %v320 = vunpack.c.0.s8 %v300
      %v321 = vunpack.c.1.s8 %v300
      %v322 = vunpack.c.2.s8 %v300
      %v323 = vunpack.c.3.s8 %v300
      %v324 = vunpack.c.0.s8 %v301
      %v325 = vunpack.c.1.s8 %v301
      %v326 = vunpack.c.2.s8 %v301
      %v327 = vunpack.c.3.s8 %v301
      %v328 = vunpack.c.0.s8 %v302
      %v329 = vunpack.c.1.s8 %v302
      %v330 = vunpack.c.2.s8 %v302
      %v331 = vunpack.c.3.s8 %v302
      %v332 = vunpack.c.0.s8 %v303
      %v333 = vunpack.c.1.s8 %v303
      %v334 = vunpack.c.2.s8 %v303
      %v335 = vunpack.c.3.s8 %v303
      %v336 = vcvt.s32.f32 %v304
      %v337 = vcvt.s32.f32 %v305
      %v338 = vcvt.s32.f32 %v306
      %v339 = vcvt.s32.f32 %v307
      %v340 = vcvt.s32.f32 %v308
      %v341 = vcvt.s32.f32 %v309
      %v342 = vcvt.s32.f32 %v310
      %v343 = vcvt.s32.f32 %v311
      %v344 = vcvt.s32.f32 %v312
      %v345 = vcvt.s32.f32 %v313
      %v346 = vcvt.s32.f32 %v314
      %v347 = vcvt.s32.f32 %v315
      %v348 = vcvt.s32.f32 %v316
      %v349 = vcvt.s32.f32 %v317
      %v350 = vcvt.s32.f32 %v318
      %v351 = vcvt.s32.f32 %v319
      %v352 = vcvt.s32.f32 %v320
      %v353 = vcvt.s32.f32 %v321
      %v354 = vcvt.s32.f32 %v322
      %v355 = vcvt.s32.f32 %v323
      %v356 = vcvt.s32.f32 %v324
      %v357 = vcvt.s32.f32 %v325
      %v358 = vcvt.s32.f32 %v326
      %v359 = vcvt.s32.f32 %v327
      %v360 = vcvt.s32.f32 %v328
      %v361 = vcvt.s32.f32 %v329
      %v362 = vcvt.s32.f32 %v330
      %v363 = vcvt.s32.f32 %v331
      %v364 = vcvt.s32.f32 %v332
      %v365 = vcvt.s32.f32 %v333
      %v366 = vcvt.s32.f32 %v334
      %v367 = vcvt.s32.f32 %v335
      %v368 = vmul.f32 %v264, %v336
      %v369 = vmul.f32 %v265, %v337
      %v370 = vmul.f32 %v266, %v338
      %v371 = vmul.f32 %v267, %v339
      %v372 = vmul.f32 %v268, %v340
      %v373 = vmul.f32 %v269, %v341
      %v374 = vmul.f32 %v270, %v342
      %v375 = vmul.f32 %v271, %v343
      %v376 = vmul.f32 %v272, %v344
      %v377 = vmul.f32 %v273, %v345
      %v378 = vmul.f32 %v274, %v346
      %v379 = vmul.f32 %v275, %v347
      %v380 = vmul.f32 %v276, %v348
      %v381 = vmul.f32 %v277, %v349
      %v382 = vmul.f32 %v278, %v350
      %v383 = vmul.f32 %v279, %v351
      %v384 = vmul.f32 %v280, %v352
      %v385 = vmul.f32 %v281, %v353
      %v386 = vmul.f32 %v282, %v354
      %v387 = vmul.f32 %v283, %v355
      %v388 = vmul.f32 %v284, %v356
      %v389 = vmul.f32 %v285, %v357
      %v390 = vmul.f32 %v286, %v358
      %v391 = vmul.f32 %v287, %v359
      %v392 = vmul.f32 %v288, %v360
      %v393 = vmul.f32 %v289, %v361
      %v394 = vmul.f32 %v290, %v362
      %v395 = vmul.f32 %v291, %v363
      %v396 = vmul.f32 %v292, %v364
      %v397 = vmul.f32 %v293, %v365
      %v398 = vmul.f32 %v294, %v366
      %v399 = vmul.f32 %v295, %v367
      %v400 = vld [vmem:[%s2] sm:$0xff]
      %v401 = vld [vmem:[%s2 + $0x8] sm:$0xff]
      %v402 = vld [vmem:[%s2 + $0x10] sm:$0xff]
      %v403 = vld [vmem:[%s2 + $0x18] sm:$0xff]
      %v404 = vld [vmem:[%s2 + $0x20] sm:$0xff]
      %v405 = vld [vmem:[%s2 + $0x28] sm:$0xff]
      %v406 = vld [vmem:[%s2 + $0x30] sm:$0xff]
      %v407 = vld [vmem:[%s2 + $0x38] sm:$0xff]
      %vm408 = vcmask 261120
      %v410 = vsel %vm408, %v368, 0
      %v413 = vsel %vm408, %v369, 0
      %v416 = vsel %vm408, %v370, 0
      %v419 = vsel %vm408, %v371, 0
      %v422 = vsel %vm408, %v372, 0
      %v425 = vsel %vm408, %v373, 0
      %v428 = vsel %vm408, %v374, 0
      %v431 = vsel %vm408, %v375, 0
      %v434 = vsel %vm408, %v376, 0
      %v437 = vsel %vm408, %v377, 0
      %v440 = vsel %vm408, %v378, 0
      %v443 = vsel %vm408, %v379, 0
      %v446 = vsel %vm408, %v380, 0
      %v449 = vsel %vm408, %v381, 0
      %v452 = vsel %vm408, %v382, 0
      %v455 = vsel %vm408, %v383, 0
      %v458 = vsel %vm408, %v384, 0
      %v461 = vsel %vm408, %v385, 0
      %v464 = vsel %vm408, %v386, 0
      %v467 = vsel %vm408, %v387, 0
      %v470 = vsel %vm408, %v388, 0
      %v473 = vsel %vm408, %v389, 0
      %v476 = vsel %vm408, %v390, 0
      %v479 = vsel %vm408, %v391, 0
      %v482 = vsel %vm408, %v392, 0
      %v485 = vsel %vm408, %v393, 0
      %v488 = vsel %vm408, %v394, 0
      %v491 = vsel %vm408, %v395, 0
      %v494 = vsel %vm408, %v396, 0
      %v497 = vsel %vm408, %v397, 0
      %v500 = vsel %vm408, %v398, 0
      %v503 = vsel %vm408, %v399, 0
      %505 = vmatprep.subr.mxu0 %v401
      %506 = vmatpush1.msra.mxu0 %v400
      %507 = vmatprep.subr.mxu0 %v403
      %508 = vmatpush1.msra.mxu0 %v402
      %509 = vmatprep.subr.mxu0 %v405
      %510 = vmatpush1.msra.mxu0 %v404
      %511 = vmatprep.subr.mxu0 %v407
      %512 = vmatpush1.msra.mxu0 %v406
      %513 = vmatprep.subr.mxu0 0.0
      %514 = vmatpush1.msra.mxu0 0.0
      %515 = vmatprep.subr.mxu0 0.0
      %516 = vmatpush1.msra.mxu0 0.0
      %517 = vmatprep.subr.mxu0 0.0
      %518 = vmatpush1.msra.mxu0 0.0
      %519 = vmatprep.subr.mxu0 0.0
      %520 = vmatpush1.msra.mxu0 0.0
      %521 = vmatprep.subr.mxu0 0.0
      %522 = vmatpush1.msra.mxu0 0.0
      %523 = vmatprep.subr.mxu0 0.0
      %524 = vmatpush1.msra.mxu0 0.0
      %525 = vmatprep.subr.mxu0 0.0
      %526 = vmatpush1.msra.mxu0 0.0
      %527 = vmatprep.subr.mxu0 0.0
      %528 = vmatpush1.msra.mxu0 0.0
      %529 = vmatprep.subr.mxu0 0.0
      %530 = vmatpush1.msra.mxu0 0.0
      %531 = vmatprep.subr.mxu0 0.0
      %532 = vmatpush1.msra.mxu0 0.0
      %533 = vmatprep.subr.mxu0 0.0
      %534 = vmatpush1.msra.mxu0 0.0
      %535 = vmatprep.subr.mxu0 0.0
      %536 = vmatpush1.msra.mxu0 0.0
      %537 = vmatprep.subr.mxu0 0.0
      %538 = vmatpush1.msra.mxu0 0.0
      %539 = vmatprep.subr.mxu0 0.0
      %540 = vmatpush1.msra.mxu0 0.0
      %541 = vmatprep.subr.mxu0 0.0
      %542 = vmatpush1.msra.mxu0 0.0
      %543 = vmatprep.subr.mxu0 0.0
      %544 = vmatpush1.msra.mxu0 0.0
      %545 = vmatprep.subr.mxu0 0.0
      %546 = vmatpush1.msra.mxu0 0.0
      %547 = vmatprep.subr.mxu0 0.0
      %548 = vmatpush1.msra.mxu0 0.0
      %549 = vmatprep.subr.mxu0 0.0
      %550 = vmatpush1.msra.mxu0 0.0
      %551 = vmatprep.subr.mxu0 0.0
      %552 = vmatpush1.msra.mxu0 0.0
      %553 = vmatprep.subr.mxu0 0.0
      %554 = vmatpush1.msra.mxu0 0.0
      %555 = vmatprep.subr.mxu0 0.0
      %556 = vmatpush1.msra.mxu0 0.0
      %557 = vmatprep.subr.mxu0 0.0
      %558 = vmatpush1.msra.mxu0 0.0
      %559 = vmatprep.subr.mxu0 0.0
      %560 = vmatpush1.msra.mxu0 0.0
      %561 = vmatprep.subr.mxu0 0.0
      %562 = vmatpush1.msra.mxu0 0.0
      %563 = vmatprep.subr.mxu0 0.0
      %564 = vmatpush1.msra.mxu0 0.0
      %565 = vmatprep.subr.mxu0 0.0
      %566 = vmatpush1.msra.mxu0 0.0
      %567 = vmatprep.subr.mxu0 0.0
      %568 = vmatpush1.msra.mxu0 0.0
      %569 = vmatprep.mubr.f32.mxu0 0.0
      %570 = vmatmul.mubr.f32.gmra.mrb[0].mxu0 %v410
      %v571 = vpop.f32.mrb[0].mxu0
      %v572 = vadd.f32 0.0, %v571
      %v573 = vpop.f32.mrb[0].mxu0
      %v574 = vadd.f32 0.0, %v573
      %575 = vmatprep.mubr.f32.mxu0 0.0
      %576 = vmatmul.mubr.f32.gmra.mrb[0].mxu0 %v413
      %v577 = vpop.f32.mrb[0].mxu0
      %v578 = vadd.f32 0.0, %v577
      %v579 = vpop.f32.mrb[0].mxu0
      %v580 = vadd.f32 0.0, %v579
      %581 = vmatprep.mubr.f32.mxu0 0.0
      %582 = vmatmul.mubr.f32.gmra.mrb[0].mxu0 %v416
      %v583 = vpop.f32.mrb[0].mxu0
      %v584 = vadd.f32 0.0, %v583
      %v585 = vpop.f32.mrb[0].mxu0
      %v586 = vadd.f32 0.0, %v585
      %587 = vmatprep.mubr.f32.mxu0 0.0
      %588 = vmatmul.mubr.f32.gmra.mrb[0].mxu0 %v419
      %v589 = vpop.f32.mrb[0].mxu0
      %v590 = vadd.f32 0.0, %v589
      %v591 = vpop.f32.mrb[0].mxu0
      %v592 = vadd.f32 0.0, %v591
      %593 = vmatprep.mubr.f32.mxu0 0.0
      %594 = vmatmul.mubr.f32.gmra.mrb[0].mxu0 %v422
      %v595 = vpop.f32.mrb[0].mxu0
      %v596 = vadd.f32 0.0, %v595
      %v597 = vpop.f32.mrb[0].mxu0
      %v598 = vadd.f32 0.0, %v597
      %599 = vmatprep.mubr.f32.mxu0 0.0
      %600 = vmatmul.mubr.f32.gmra.mrb[0].mxu0 %v425
      %v601 = vpop.f32.mrb[0].mxu0
      %v602 = vadd.f32 0.0, %v601
      %v603 = vpop.f32.mrb[0].mxu0
      %v604 = vadd.f32 0.0, %v603
      %605 = vmatprep.mubr.f32.mxu0 0.0
      %606 = vmatmul.mubr.f32.gmra.mrb[0].mxu0 %v428
      %v607 = vpop.f32.mrb[0].mxu0
      %v608 = vadd.f32 0.0, %v607
      %v609 = vpop.f32.mrb[0].mxu0
      %v610 = vadd.f32 0.0, %v609
      %611 = vmatprep.mubr.f32.mxu0 0.0
      %612 = vmatmul.mubr.f32.gmra.mrb[0].mxu0 %v431
      %v613 = vpop.f32.mrb[0].mxu0
      %v614 = vadd.f32 0.0, %v613
      %v615 = vpop.f32.mrb[0].mxu0
      %v616 = vadd.f32 0.0, %v615
      %617 = vmatprep.mubr.f32.mxu0 0.0
      %618 = vmatmul.mubr.f32.gmra.mrb[0].mxu0 %v434
      %v619 = vpop.f32.mrb[0].mxu0
      %v620 = vadd.f32 0.0, %v619
      %v621 = vpop.f32.mrb[0].mxu0
      %v622 = vadd.f32 0.0, %v621
      %623 = vmatprep.mubr.f32.mxu0 0.0
      %624 = vmatmul.mubr.f32.gmra.mrb[0].mxu0 %v437
      %v625 = vpop.f32.mrb[0].mxu0
      %v626 = vadd.f32 0.0, %v625
      %v627 = vpop.f32.mrb[0].mxu0
      %v628 = vadd.f32 0.0, %v627
      %629 = vmatprep.mubr.f32.mxu0 0.0
      %630 = vmatmul.mubr.f32.gmra.mrb[0].mxu0 %v440
      %v631 = vpop.f32.mrb[0].mxu0
      %v632 = vadd.f32 0.0, %v631
      %v633 = vpop.f32.mrb[0].mxu0
      %v634 = vadd.f32 0.0, %v633
      %635 = vmatprep.mubr.f32.mxu0 0.0
      %636 = vmatmul.mubr.f32.gmra.mrb[0].mxu0 %v443
      %v637 = vpop.f32.mrb[0].mxu0
      %v638 = vadd.f32 0.0, %v637
      %v639 = vpop.f32.mrb[0].mxu0
      %v640 = vadd.f32 0.0, %v639
      %641 = vmatprep.mubr.f32.mxu0 0.0
      %642 = vmatmul.mubr.f32.gmra.mrb[0].mxu0 %v446
      %v643 = vpop.f32.mrb[0].mxu0
      %v644 = vadd.f32 0.0, %v643
      %v645 = vpop.f32.mrb[0].mxu0
      %v646 = vadd.f32 0.0, %v645
      %647 = vmatprep.mubr.f32.mxu0 0.0
      %648 = vmatmul.mubr.f32.gmra.mrb[0].mxu0 %v449
      %v649 = vpop.f32.mrb[0].mxu0
      %v650 = vadd.f32 0.0, %v649
      %v651 = vpop.f32.mrb[0].mxu0
      %v652 = vadd.f32 0.0, %v651
      %653 = vmatprep.mubr.f32.mxu0 0.0
      %654 = vmatmul.mubr.f32.gmra.mrb[0].mxu0 %v452
      %v655 = vpop.f32.mrb[0].mxu0
      %v656 = vadd.f32 0.0, %v655
      %v657 = vpop.f32.mrb[0].mxu0
      %v658 = vadd.f32 0.0, %v657
      %659 = vmatprep.mubr.f32.mxu0 0.0
      %660 = vmatmul.mubr.f32.gmra.mrb[0].mxu0 %v455
      %v661 = vpop.f32.mrb[0].mxu0
      %v662 = vadd.f32 0.0, %v661
      %v663 = vpop.f32.mrb[0].mxu0
      %v664 = vadd.f32 0.0, %v663
      %665 = vmatprep.mubr.f32.mxu0 0.0
      %666 = vmatmul.mubr.f32.gmra.mrb[0].mxu0 %v458
      %v667 = vpop.f32.mrb[0].mxu0
      %v668 = vadd.f32 0.0, %v667
      %v669 = vpop.f32.mrb[0].mxu0
      %v670 = vadd.f32 0.0, %v669
      %671 = vmatprep.mubr.f32.mxu0 0.0
      %672 = vmatmul.mubr.f32.gmra.mrb[0].mxu0 %v461
      %v673 = vpop.f32.mrb[0].mxu0
      %v674 = vadd.f32 0.0, %v673
      %v675 = vpop.f32.mrb[0].mxu0
      %v676 = vadd.f32 0.0, %v675
      %677 = vmatprep.mubr.f32.mxu0 0.0
      %678 = vmatmul.mubr.f32.gmra.mrb[0].mxu0 %v464
      %v679 = vpop.f32.mrb[0].mxu0
      %v680 = vadd.f32 0.0, %v679
      %v681 = vpop.f32.mrb[0].mxu0
      %v682 = vadd.f32 0.0, %v681
      %683 = vmatprep.mubr.f32.mxu0 0.0
      %684 = vmatmul.mubr.f32.gmra.mrb[0].mxu0 %v467
      %v685 = vpop.f32.mrb[0].mxu0
      %v686 = vadd.f32 0.0, %v685
      %v687 = vpop.f32.mrb[0].mxu0
      %v688 = vadd.f32 0.0, %v687
      %689 = vmatprep.mubr.f32.mxu0 0.0
      %690 = vmatmul.mubr.f32.gmra.mrb[0].mxu0 %v470
      %v691 = vpop.f32.mrb[0].mxu0
      %v692 = vadd.f32 0.0, %v691
      %v693 = vpop.f32.mrb[0].mxu0
      %v694 = vadd.f32 0.0, %v693
      %695 = vmatprep.mubr.f32.mxu0 0.0
      %696 = vmatmul.mubr.f32.gmra.mrb[0].mxu0 %v473
      %v697 = vpop.f32.mrb[0].mxu0
      %v698 = vadd.f32 0.0, %v697
      %v699 = vpop.f32.mrb[0].mxu0
      %v700 = vadd.f32 0.0, %v699
      %701 = vmatprep.mubr.f32.mxu0 0.0
      %702 = vmatmul.mubr.f32.gmra.mrb[0].mxu0 %v476
      %v703 = vpop.f32.mrb[0].mxu0
      %v704 = vadd.f32 0.0, %v703
      %v705 = vpop.f32.mrb[0].mxu0
      %v706 = vadd.f32 0.0, %v705
      %707 = vmatprep.mubr.f32.mxu0 0.0
      %708 = vmatmul.mubr.f32.gmra.mrb[0].mxu0 %v479
      %v709 = vpop.f32.mrb[0].mxu0
      %v710 = vadd.f32 0.0, %v709
      %v711 = vpop.f32.mrb[0].mxu0
      %v712 = vadd.f32 0.0, %v711
      %713 = vmatprep.mubr.f32.mxu0 0.0
      %714 = vmatmul.mubr.f32.gmra.mrb[0].mxu0 %v482
      %v715 = vpop.f32.mrb[0].mxu0
      %v716 = vadd.f32 0.0, %v715
      %v717 = vpop.f32.mrb[0].mxu0
      %v718 = vadd.f32 0.0, %v717
      %719 = vmatprep.mubr.f32.mxu0 0.0
      %720 = vmatmul.mubr.f32.gmra.mrb[0].mxu0 %v485
      %v721 = vpop.f32.mrb[0].mxu0
      %v722 = vadd.f32 0.0, %v721
      %v723 = vpop.f32.mrb[0].mxu0
      %v724 = vadd.f32 0.0, %v723
      %725 = vmatprep.mubr.f32.mxu0 0.0
      %726 = vmatmul.mubr.f32.gmra.mrb[0].mxu0 %v488
      %v727 = vpop.f32.mrb[0].mxu0
      %v728 = vadd.f32 0.0, %v727
      %v729 = vpop.f32.mrb[0].mxu0
      %v730 = vadd.f32 0.0, %v729
      %731 = vmatprep.mubr.f32.mxu0 0.0
      %732 = vmatmul.mubr.f32.gmra.mrb[0].mxu0 %v491
      %v733 = vpop.f32.mrb[0].mxu0
      %v734 = vadd.f32 0.0, %v733
      %v735 = vpop.f32.mrb[0].mxu0
      %v736 = vadd.f32 0.0, %v735
      %737 = vmatprep.mubr.f32.mxu0 0.0
      %738 = vmatmul.mubr.f32.gmra.mrb[0].mxu0 %v494
      %v739 = vpop.f32.mrb[0].mxu0
      %v740 = vadd.f32 0.0, %v739
      %v741 = vpop.f32.mrb[0].mxu0
      %v742 = vadd.f32 0.0, %v741
      %743 = vmatprep.mubr.f32.mxu0 0.0
      %744 = vmatmul.mubr.f32.gmra.mrb[0].mxu0 %v497
      %v745 = vpop.f32.mrb[0].mxu0
      %v746 = vadd.f32 0.0, %v745
      %v747 = vpop.f32.mrb[0].mxu0
      %v748 = vadd.f32 0.0, %v747
      %749 = vmatprep.mubr.f32.mxu0 0.0
      %750 = vmatmul.mubr.f32.gmra.mrb[0].mxu0 %v500
      %v751 = vpop.f32.mrb[0].mxu0
      %v752 = vadd.f32 0.0, %v751
      %v753 = vpop.f32.mrb[0].mxu0
      %v754 = vadd.f32 0.0, %v753
      %755 = vmatprep.mubr.f32.mxu0 0.0
      %756 = vmatmul.mubr.f32.gmra.mrb[0].mxu0 %v503
      %v757 = vpop.f32.mrb[0].mxu0
      %v758 = vadd.f32 0.0, %v757
      %v759 = vpop.f32.mrb[0].mxu0
      %v760 = vadd.f32 0.0, %v759
      %761 = vdwg.mxu0
      %v762 = vld [vmem:[%s3] sm:$0x1]
      %v764 = vlaneseq
      %v765 = vshrl.u32 %v764, 7
      %v766 = vsub.s32 0, %v765
      %v767 = vrot.slane %v762, %v766
      %v769 = vadd.f32 %v572, %v767
      %v770 = vadd.f32 %v578, %v767
      %v771 = vadd.f32 %v584, %v767
      %v772 = vadd.f32 %v590, %v767
      %v773 = vadd.f32 %v596, %v767
      %v774 = vadd.f32 %v602, %v767
      %v775 = vadd.f32 %v608, %v767
      %v776 = vadd.f32 %v614, %v767
      %v777 = vadd.f32 %v620, %v767
      %v778 = vadd.f32 %v626, %v767
      %v779 = vadd.f32 %v632, %v767
      %v780 = vadd.f32 %v638, %v767
      %v781 = vadd.f32 %v644, %v767
      %v782 = vadd.f32 %v650, %v767
      %v783 = vadd.f32 %v656, %v767
      %v784 = vadd.f32 %v662, %v767
      %v785 = vadd.f32 %v668, %v767
      %v786 = vadd.f32 %v674, %v767
      %v787 = vadd.f32 %v680, %v767
      %v788 = vadd.f32 %v686, %v767
      %v789 = vadd.f32 %v692, %v767
      %v790 = vadd.f32 %v698, %v767
      %v791 = vadd.f32 %v704, %v767
      %v792 = vadd.f32 %v710, %v767
      %v793 = vadd.f32 %v716, %v767
      %v794 = vadd.f32 %v722, %v767
      %v795 = vadd.f32 %v728, %v767
      %v796 = vadd.f32 %v734, %v767
      %v797 = vadd.f32 %v740, %v767
      %v798 = vadd.f32 %v746, %v767
      %v799 = vadd.f32 %v752, %v767
      %v800 = vadd.f32 %v758, %v767
      %801 = vst [vmem:[%s256] sm:$0xff] %v769
      %802 = vst [vmem:[%s256 + $0x8] sm:$0xff] %v770
      %803 = vst [vmem:[%s256 + $0x10] sm:$0xff] %v771
      %804 = vst [vmem:[%s256 + $0x18] sm:$0xff] %v772
      %805 = vst [vmem:[%s256 + $0x20] sm:$0xff] %v773
      %806 = vst [vmem:[%s256 + $0x28] sm:$0xff] %v774
      %807 = vst [vmem:[%s256 + $0x30] sm:$0xff] %v775
      %808 = vst [vmem:[%s256 + $0x38] sm:$0xff] %v776
      %809 = vst [vmem:[%s256 + $0x40] sm:$0xff] %v777
      %810 = vst [vmem:[%s256 + $0x48] sm:$0xff] %v778
      %811 = vst [vmem:[%s256 + $0x50] sm:$0xff] %v779
      %812 = vst [vmem:[%s256 + $0x58] sm:$0xff] %v780
      %813 = vst [vmem:[%s256 + $0x60] sm:$0xff] %v781
      %814 = vst [vmem:[%s256 + $0x68] sm:$0xff] %v782
      %815 = vst [vmem:[%s256 + $0x70] sm:$0xff] %v783
      %816 = vst [vmem:[%s256 + $0x78] sm:$0xff] %v784
      %817 = vst [vmem:[%s256 + $0x80] sm:$0xff] %v785
      %818 = vst [vmem:[%s256 + $0x88] sm:$0xff] %v786
      %819 = vst [vmem:[%s256 + $0x90] sm:$0xff] %v787
      %820 = vst [vmem:[%s256 + $0x98] sm:$0xff] %v788
      %821 = vst [vmem:[%s256 + $0xa0] sm:$0xff] %v789
      %822 = vst [vmem:[%s256 + $0xa8] sm:$0xff] %v790
      %823 = vst [vmem:[%s256 + $0xb0] sm:$0xff] %v791
      %824 = vst [vmem:[%s256 + $0xb8] sm:$0xff] %v792
      %825 = vst [vmem:[%s256 + $0xc0] sm:$0xff] %v793
      %826 = vst [vmem:[%s256 + $0xc8] sm:$0xff] %v794
      %827 = vst [vmem:[%s256 + $0xd0] sm:$0xff] %v795
      %828 = vst [vmem:[%s256 + $0xd8] sm:$0xff] %v796
      %829 = vst [vmem:[%s256 + $0xe0] sm:$0xff] %v797
      %830 = vst [vmem:[%s256 + $0xe8] sm:$0xff] %v798
      %831 = vst [vmem:[%s256 + $0xf0] sm:$0xff] %v799
      %832 = vst [vmem:[%s256 + $0xf8] sm:$0xff] %v800
      %v833 = vpack.c.bf16 %v580, %v574
      %v834 = vpack.c.bf16 %v592, %v586
      %v835 = vpack.c.bf16 %v604, %v598
      %v836 = vpack.c.bf16 %v616, %v610
      %v837 = vpack.c.bf16 %v628, %v622
      %v838 = vpack.c.bf16 %v640, %v634
      %v839 = vpack.c.bf16 %v652, %v646
      %v840 = vpack.c.bf16 %v664, %v658
      %v841 = vpack.c.bf16 %v676, %v670
      %v842 = vpack.c.bf16 %v688, %v682
      %v843 = vpack.c.bf16 %v700, %v694
      %v844 = vpack.c.bf16 %v712, %v706
      %v845 = vpack.c.bf16 %v724, %v718
      %v846 = vpack.c.bf16 %v736, %v730
      %v847 = vpack.c.bf16 %v748, %v742
      %v848 = vpack.c.bf16 %v760, %v754
      %v865 = vunpack.c.l.b16 %v833
      %v866 = vunpack.c.h.b16 %v833
      %v867 = vunpack.c.l.b16 %v834
      %v868 = vunpack.c.h.b16 %v834
      %v869 = vunpack.c.l.b16 %v835
      %v870 = vunpack.c.h.b16 %v835
      %v871 = vunpack.c.l.b16 %v836
      %v872 = vunpack.c.h.b16 %v836
      %v873 = vunpack.c.l.b16 %v837
      %v874 = vunpack.c.h.b16 %v837
      %v875 = vunpack.c.l.b16 %v838
      %v876 = vunpack.c.h.b16 %v838
      %v877 = vunpack.c.l.b16 %v839
      %v878 = vunpack.c.h.b16 %v839
      %v879 = vunpack.c.l.b16 %v840
      %v880 = vunpack.c.h.b16 %v840
      %v881 = vunpack.c.l.b16 %v841
      %v882 = vunpack.c.h.b16 %v841
      %v883 = vunpack.c.l.b16 %v842
      %v884 = vunpack.c.h.b16 %v842
      %v885 = vunpack.c.l.b16 %v843
      %v886 = vunpack.c.h.b16 %v843
      %v887 = vunpack.c.l.b16 %v844
      %v888 = vunpack.c.h.b16 %v844
      %v889 = vunpack.c.l.b16 %v845
      %v890 = vunpack.c.h.b16 %v845
      %v891 = vunpack.c.l.b16 %v846
      %v892 = vunpack.c.h.b16 %v846
      %v893 = vunpack.c.l.b16 %v847
      %v894 = vunpack.c.h.b16 %v847
      %v895 = vunpack.c.l.b16 %v848
      %v896 = vunpack.c.h.b16 %v848
      %v897 = vpack.c.b16 %v865, %v865
      %v898 = vpack.c.b16 %v866, %v866
      %v899 = vpack.c.b16 %v867, %v867
      %v900 = vpack.c.b16 %v868, %v868
      %v901 = vpack.c.b16 %v869, %v869
      %v902 = vpack.c.b16 %v870, %v870
      %v903 = vpack.c.b16 %v871, %v871
      %v904 = vpack.c.b16 %v872, %v872
      %v905 = vpack.c.b16 %v873, %v873
      %v906 = vpack.c.b16 %v874, %v874
      %v907 = vpack.c.b16 %v875, %v875
      %v908 = vpack.c.b16 %v876, %v876
      %v909 = vpack.c.b16 %v877, %v877
      %v910 = vpack.c.b16 %v878, %v878
      %v911 = vpack.c.b16 %v879, %v879
      %v912 = vpack.c.b16 %v880, %v880
      %v913 = vpack.c.b16 %v881, %v881
      %v914 = vpack.c.b16 %v882, %v882
      %v915 = vpack.c.b16 %v883, %v883
      %v916 = vpack.c.b16 %v884, %v884
      %v917 = vpack.c.b16 %v885, %v885
      %v918 = vpack.c.b16 %v886, %v886
      %v919 = vpack.c.b16 %v887, %v887
      %v920 = vpack.c.b16 %v888, %v888
      %v921 = vpack.c.b16 %v889, %v889
      %v922 = vpack.c.b16 %v890, %v890
      %v923 = vpack.c.b16 %v891, %v891
      %v924 = vpack.c.b16 %v892, %v892
      %v925 = vpack.c.b16 %v893, %v893
      %v926 = vpack.c.b16 %v894, %v894
      %v927 = vpack.c.b16 %v895, %v895
      %v928 = vpack.c.b16 %v896, %v896
      %961 = vst [vmem:[%s262] sm:$0xf] %v897
      %962 = vst [vmem:[%s262 + $0x4] sm:$0xf] %v898
      %963 = vst [vmem:[%s262 + $0x8] sm:$0xf] %v899
      %964 = vst [vmem:[%s262 + $0xc] sm:$0xf] %v900
      %965 = vst [vmem:[%s262 + $0x10] sm:$0xf] %v901
      %966 = vst [vmem:[%s262 + $0x14] sm:$0xf] %v902
      %967 = vst [vmem:[%s262 + $0x18] sm:$0xf] %v903
      %968 = vst [vmem:[%s262 + $0x1c] sm:$0xf] %v904
      %969 = vst [vmem:[%s262 + $0x20] sm:$0xf] %v905
      %970 = vst [vmem:[%s262 + $0x24] sm:$0xf] %v906
      %971 = vst [vmem:[%s262 + $0x28] sm:$0xf] %v907
      %972 = vst [vmem:[%s262 + $0x2c] sm:$0xf] %v908
      %973 = vst [vmem:[%s262 + $0x30] sm:$0xf] %v909
      %974 = vst [vmem:[%s262 + $0x34] sm:$0xf] %v910
      %975 = vst [vmem:[%s262 + $0x38] sm:$0xf] %v911
      %976 = vst [vmem:[%s262 + $0x3c] sm:$0xf] %v912
      %977 = vst [vmem:[%s262 + $0x40] sm:$0xf] %v913
      %978 = vst [vmem:[%s262 + $0x44] sm:$0xf] %v914
      %979 = vst [vmem:[%s262 + $0x48] sm:$0xf] %v915
      %980 = vst [vmem:[%s262 + $0x4c] sm:$0xf] %v916
      %981 = vst [vmem:[%s262 + $0x50] sm:$0xf] %v917
      %982 = vst [vmem:[%s262 + $0x54] sm:$0xf] %v918
      %983 = vst [vmem:[%s262 + $0x58] sm:$0xf] %v919
      %984 = vst [vmem:[%s262 + $0x5c] sm:$0xf] %v920
      %985 = vst [vmem:[%s262 + $0x60] sm:$0xf] %v921
      %986 = vst [vmem:[%s262 + $0x64] sm:$0xf] %v922
      %987 = vst [vmem:[%s262 + $0x68] sm:$0xf] %v923
      %988 = vst [vmem:[%s262 + $0x6c] sm:$0xf] %v924
      %989 = vst [vmem:[%s262 + $0x70] sm:$0xf] %v925
      %990 = vst [vmem:[%s262 + $0x74] sm:$0xf] %v926
      %991 = vst [vmem:[%s262 + $0x78] sm:$0xf] %v927
      %992 = vst [vmem:[%s262 + $0x7c] sm:$0xf] %v928
      %s993 = smul.u32 32, %s17
      %p994 = scmp.lt.s32.totalorder %s993, 63
      %s995 = scalar_select %p994, %s993, 63
      %s996 = smul.addr %s995, 8
      %s997 = scalar_lea.vmem %s4, %s996
      %s998 = smul.u32 32, %s17
      %p999 = scmp.lt.s32.totalorder %s998, 63
      %s1000 = scalar_select %p999, %s998, 63
      %s1001 = smul.addr %s1000, 4
      %s1002 = scalar_lea.vmem %s5, %s1001
      // Predicated region
      $region37: #{_graphsage_forward.2} parent=35 // pred_check
        %p1003 = pneg %p129
      $region38: #{_graphsage_forward.2} parent=35 // pred_check_branch
        %1005 = sbr.rel (%p1003) target = $region40
      $region39: #{_graphsage_forward.2} parent=35 // pred_region
        %s1006 = smul.u32 32, %s17
      $region40: #{_graphsage_forward.2} parent=35 // pred_fallthru
        _
      // Predicated region
      $region41: #{_graphsage_forward.2} parent=35 // pred_check
        %p1007 = pneg %p155
      $region42: #{_graphsage_forward.2} parent=35 // pred_check_branch
        %1009 = sbr.rel (%p1007) target = $region44
      $region43: #{_graphsage_forward.2} parent=35 // pred_region
        %s1010 = smul.u32 32, %s17
      $region44: #{_graphsage_forward.2} parent=35 // pred_fallthru
        _
    $region36: #{_graphsage_forward.2} parent=5 // pred_fallthru
      _
    %p1011 = scmp.le.s32.totalorder 2, %s12
    // Predicated region
    $region45: #{_graphsage_forward.2} parent=5 // pred_check
      %p1012 = pneg %p1011
    $region46: #{_graphsage_forward.2} parent=5 // pred_check_branch
      %1014 = sbr.rel (%p1012) target = $region48
    $region47: #{_graphsage_forward.2} parent=5 // pred_region
      %s1015 = ssub.s32 %s12, 2
      // Predicated region
      $region49: #{_graphsage_forward.2} parent=47 // pred_check
        %p1016 = pneg %p135
      $region50: #{_graphsage_forward.2} parent=47 // pred_check_branch
        %1018 = sbr.rel (%p1016) target = $region52
      $region51: #{_graphsage_forward.2} parent=47 // pred_region
        %s1019 = smul.u32 32, %s18
        %p1020 = scmp.lt.s32.totalorder %s1019, 63
        %s1021 = scalar_select %p1020, %s1019, 63
        %s1022 = smul.addr %s1021, 8
        %s1023 = scalar_lea.vmem %s4, %s1022
      $region52: #{_graphsage_forward.2} parent=47 // pred_fallthru
        _
      // Predicated region
      $region53: #{_graphsage_forward.2} parent=47 // pred_check
        %p1024 = pneg %p161
      $region54: #{_graphsage_forward.2} parent=47 // pred_check_branch
        %1026 = sbr.rel (%p1024) target = $region56
      $region55: #{_graphsage_forward.2} parent=47 // pred_region
        %s1027 = smul.u32 32, %s18
        %p1028 = scmp.lt.s32.totalorder %s1027, 63
        %s1029 = scalar_select %p1028, %s1027, 63
        %s1030 = smul.addr %s1029, 4
        %s1031 = scalar_lea.vmem %s5, %s1030
      $region56: #{_graphsage_forward.2} parent=47 // pred_fallthru
        _
    $region48: #{_graphsage_forward.2} parent=5 // pred_fallthru
      _
  $region6: #{_graphsage_forward.2} parent=0 // loop_footer
    %s16 = sadd.s32 1, %s12
  $region7: #{_graphsage_forward.2} parent=0 // loop_footer_branch
    %11 = sbr.rel target = $region3
  $region8: #{_graphsage_forward.2} parent=0 // loop_exit
    _

// kernel: _graphsage_forward.3
$region0: #{_graphsage_forward.3}
  #allocation0 [shape = 'u32[]', space=smem, size = 0x4, offset = 0x4, fixed_abs, tag = 'smem constant byte address 0x4 - core index']
  #allocation1 [shape = 'u32[144,128]{1,0:T(1,128)}', space=vmem, size = 0x12000, scoped, tag = 'internal scratch']
  #allocation2 [shape = 'f32[256,128]{1,0:T(8,128)}', space=vmem, size = 0x20000, scoped, tag = 'scratch operand']
  %s0 = inlined_call_operand.vmem [shape: bf16[512,512], index: 0, kind: input, shape index: {}]
  %s1 = inlined_call_operand.vmem [shape: bf16[512,128], index: 1, kind: input, shape index: {}]
  %s2 = inlined_call_operand.vmem [shape: f32[512,128], index: 2, kind: input, shape index: {}]
  %s3 = inlined_call_operand.vmem [shape: f32[512,1], index: 3, kind: input, shape index: {}]
  %s4 = inlined_call_operand.vmem [shape: f32[512,128], index: 4, kind: output, shape index: {}]
  %s5 = sld [smem:[#allocation0]]
  $region57: #{_graphsage_forward.3} parent=0
    _
  %s7 = ssub.s32 1, %s5
  %s8 = scalar_select 0, %s7, %s5
  loop: start=0, step=1, limit=4
  $region2: #{_graphsage_forward.3} parent=0 // loop_pre_header
    _
  $region3: #{_graphsage_forward.3} parent=0 // loop_header
    %s10 = sphi 0, %s14
    %p11 = scmp.ge.s32.totalorder %s10, 4
    %s17 = sphi 0, %s29
    %s18 = sphi 0, %s25
    %s19 = sphi 0, %s17
    %s20 = sphi 0, %s18
    %s21 = sphi 0, %s19
    %s22 = sphi 0, %s20
    %s34 = sphi 0, %s36
    %s37 = sphi 0, %s34
    %s38 = sphi 0, %s37
    %s54 = sphi 0, %s38
    %s58 = sphi 0, %s58
    %s60 = sphi 0, %s58
    %s61 = sphi 0, %s60
    %s75 = sphi 0, %s61
    %s81 = sphi 0, %s83
    %s84 = sphi 0, %s81
    %s85 = sphi 0, %s84
    %s101 = sphi 0, %s85
    %s107 = sphi 0, %s109
    %s110 = sphi 0, %s107
    %s111 = sphi 0, %s110
    %s127 = sphi 0, %s111
    %s133 = sphi 0, %s135
    %s136 = sphi 0, %s133
    %s137 = sphi 0, %s136
    %s153 = sphi 0, %s137
  $region4: #{_graphsage_forward.3} parent=0 // loop_header_branch
    %13 = sbr.rel (%p11) target = $region8
  $region5: #{_graphsage_forward.3} parent=0 // loop_body
    %s15 = ssub.s32 %s10, 1
    %s16 = ssub.s32 %s10, 2
    %s23 = sadd.s32 1, %s18
    %p24 = scmp.ge.s32.totalorder %s23, 1
    %s25 = scalar_select %p24, 0, %s23
    %s26 = sadd.s32 1, %s17
    %s27 = scalar_select %p24, %s26, %s17
    %p28 = scmp.ge.s32.totalorder %s27, 2
    %s29 = scalar_select %p28, 0, %s27
    %s30 = ssub.s32 %s17, %s29
    %s31 = ssub.s32 %s18, %s25
    %s32 = sor.u32 %s30, %s31
    %p33 = scmp.eq.s32.totalorder %s32, 0
    %s35 = sadd.s32 %s34, 1
    %s36 = scalar_select %p33, %s34, %s35
    %p39 = pneg %p33
    %p40 = scmp.eq.s32.totalorder %s10, 1
    %p41 = por %p39, %p40
    %p42 = scmp.ne.s32.totalorder %s34, %s37
    %p43 = scmp.eq.s32.totalorder %s10, 0
    %p44 = por %p42, %p43
    %p45 = scmp.ne.s32.totalorder %s34, %s37
    %p46 = scmp.eq.s32.totalorder %s15, 1
    %p47 = por %p45, %p46
    %p48 = scmp.ne.s32.totalorder %s37, %s38
    %p49 = scmp.eq.s32.totalorder %s15, 0
    %p50 = por %p48, %p49
    %p51 = scmp.ne.s32.totalorder %s37, %s38
    %p52 = scmp.eq.s32.totalorder %s16, 1
    %p53 = por %p51, %p52
    %p55 = scmp.ne.s32.totalorder %s38, %s54
    %p56 = scmp.eq.s32.totalorder %s16, 0
    %p57 = por %p55, %p56
    %s59 = sadd.s32 %s58, 1
    %p62 = scmp.eq.s32.totalorder %s10, 1
    %p63 = scmp.ne.s32.totalorder %s58, %s60
    %p64 = scmp.eq.s32.totalorder %s10, 0
    %p65 = por %p63, %p64
    %p66 = scmp.ne.s32.totalorder %s58, %s60
    %p67 = scmp.eq.s32.totalorder %s15, 1
    %p68 = por %p66, %p67
    %p69 = scmp.ne.s32.totalorder %s60, %s61
    %p70 = scmp.eq.s32.totalorder %s15, 0
    %p71 = por %p69, %p70
    %p72 = scmp.ne.s32.totalorder %s60, %s61
    %p73 = scmp.eq.s32.totalorder %s16, 1
    %p74 = por %p72, %p73
    %p76 = scmp.ne.s32.totalorder %s61, %s75
    %p77 = scmp.eq.s32.totalorder %s16, 0
    %p78 = por %p76, %p77
    %s79 = ssub.s32 %s17, %s29
    %p80 = scmp.eq.s32.totalorder %s79, 0
    %s82 = sadd.s32 %s81, 1
    %s83 = scalar_select %p80, %s81, %s82
    %p86 = pneg %p80
    %p87 = scmp.eq.s32.totalorder %s10, 1
    %p88 = por %p86, %p87
    %p89 = scmp.ne.s32.totalorder %s81, %s84
    %p90 = scmp.eq.s32.totalorder %s10, 0
    %p91 = por %p89, %p90
    %p92 = scmp.ne.s32.totalorder %s81, %s84
    %p93 = scmp.eq.s32.totalorder %s15, 1
    %p94 = por %p92, %p93
    %p95 = scmp.ne.s32.totalorder %s84, %s85
    %p96 = scmp.eq.s32.totalorder %s15, 0
    %p97 = por %p95, %p96
    %p98 = scmp.ne.s32.totalorder %s84, %s85
    %p99 = scmp.eq.s32.totalorder %s16, 1
    %p100 = por %p98, %p99
    %p102 = scmp.ne.s32.totalorder %s85, %s101
    %p103 = scmp.eq.s32.totalorder %s16, 0
    %p104 = por %p102, %p103
    %s105 = ssub.s32 %s17, %s29
    %p106 = scmp.eq.s32.totalorder %s105, 0
    %s108 = sadd.s32 %s107, 1
    %s109 = scalar_select %p106, %s107, %s108
    %p112 = pneg %p106
    %p113 = scmp.eq.s32.totalorder %s10, 1
    %p114 = por %p112, %p113
    %p115 = scmp.ne.s32.totalorder %s107, %s110
    %p116 = scmp.eq.s32.totalorder %s10, 0
    %p117 = por %p115, %p116
    %p118 = scmp.ne.s32.totalorder %s107, %s110
    %p119 = scmp.eq.s32.totalorder %s15, 1
    %p120 = por %p118, %p119
    %p121 = scmp.ne.s32.totalorder %s110, %s111
    %p122 = scmp.eq.s32.totalorder %s15, 0
    %p123 = por %p121, %p122
    %p124 = scmp.ne.s32.totalorder %s110, %s111
    %p125 = scmp.eq.s32.totalorder %s16, 1
    %p126 = por %p124, %p125
    %p128 = scmp.ne.s32.totalorder %s111, %s127
    %p129 = scmp.eq.s32.totalorder %s16, 0
    %p130 = por %p128, %p129
    %s131 = ssub.s32 %s17, %s29
    %p132 = scmp.eq.s32.totalorder %s131, 0
    %s134 = sadd.s32 %s133, 1
    %s135 = scalar_select %p132, %s133, %s134
    %p138 = pneg %p132
    %p139 = scmp.eq.s32.totalorder %s10, 1
    %p140 = por %p138, %p139
    %p141 = scmp.ne.s32.totalorder %s133, %s136
    %p142 = scmp.eq.s32.totalorder %s10, 0
    %p143 = por %p141, %p142
    %p144 = scmp.ne.s32.totalorder %s133, %s136
    %p145 = scmp.eq.s32.totalorder %s15, 1
    %p146 = por %p144, %p145
    %p147 = scmp.ne.s32.totalorder %s136, %s137
    %p148 = scmp.eq.s32.totalorder %s15, 0
    %p149 = por %p147, %p148
    %p150 = scmp.ne.s32.totalorder %s136, %s137
    %p151 = scmp.eq.s32.totalorder %s16, 1
    %p152 = por %p150, %p151
    %p154 = scmp.ne.s32.totalorder %s137, %s153
    %p155 = scmp.eq.s32.totalorder %s16, 0
    %p156 = por %p154, %p155
    %p157 = scmp.le.s32.totalorder 1, %s10
    %p158 = scmp.lt.s32.totalorder %s10, 3
    %p159 = pnand %p157, %p158
    %p160 = pneg %p159
    // Predicated region
    $region9: #{_graphsage_forward.3} parent=5 // pred_check
      _
    $region10: #{_graphsage_forward.3} parent=5 // pred_check_branch
      %162 = sbr.rel (%p159) target = $region12
    $region11: #{_graphsage_forward.3} parent=5 // pred_region
      %s163 = ssub.s32 %s10, 1
      // Predicated region
      $region13: #{_graphsage_forward.3} parent=11 // pred_check
        %p164 = pneg %p71
      $region14: #{_graphsage_forward.3} parent=11 // pred_check_branch
        %166 = sbr.rel (%p164) target = $region16
      $region15: #{_graphsage_forward.3} parent=11 // pred_region
        _
      $region16: #{_graphsage_forward.3} parent=11 // pred_fallthru
        _
    $region12: #{_graphsage_forward.3} parent=5 // pred_fallthru
      _
    %p167 = scmp.lt.s32.totalorder %s10, 2
    // Predicated region
    $region17: #{_graphsage_forward.3} parent=5 // pred_check
      %p168 = pneg %p167
    $region18: #{_graphsage_forward.3} parent=5 // pred_check_branch
      %170 = sbr.rel (%p168) target = $region20
    $region19: #{_graphsage_forward.3} parent=5 // pred_region
      // Predicated region
      $region21: #{_graphsage_forward.3} parent=19 // pred_check
        %p171 = pneg %p44
      $region22: #{_graphsage_forward.3} parent=19 // pred_check_branch
        %173 = sbr.rel (%p171) target = $region24
      $region23: #{_graphsage_forward.3} parent=19 // pred_region
        %s174 = smul.u32 32, %s17
        %s175 = smul.u32 4, %s18
        %p176 = scmp.lt.s32.totalorder %s174, 63
        %s177 = scalar_select %p176, %s174, 63
        %p178 = scmp.lt.s32.totalorder %s175, 3
        %s179 = scalar_select %p178, %s175, 3
        %s180 = smul.addr %s177, 4
        %s181 = sadd.s32 %s179, %s180
        %s182 = smul.addr %s181, 4
        %s183 = scalar_lea.vmem %s0, %s182
        %s184 = smul.u32 32, %s17
        %s185 = smul.u32 4, %s18
      $region24: #{_graphsage_forward.3} parent=19 // pred_fallthru
        _
      // Predicated region
      $region25: #{_graphsage_forward.3} parent=19 // pred_check
        %p186 = pneg %p91
      $region26: #{_graphsage_forward.3} parent=19 // pred_check_branch
        %188 = sbr.rel (%p186) target = $region28
      $region27: #{_graphsage_forward.3} parent=19 // pred_region
        %s189 = smul.u32 32, %s17
        %p190 = scmp.lt.s32.totalorder %s189, 63
        %s191 = scalar_select %p190, %s189, 63
        %s192 = smul.addr %s191, 8
        %s193 = scalar_lea.vmem %s2, %s192
        %s194 = smul.u32 32, %s17
      $region28: #{_graphsage_forward.3} parent=19 // pred_fallthru
        _
      // Predicated region
      $region29: #{_graphsage_forward.3} parent=19 // pred_check
        %p195 = pneg %p117
      $region30: #{_graphsage_forward.3} parent=19 // pred_check_branch
        %197 = sbr.rel (%p195) target = $region32
      $region31: #{_graphsage_forward.3} parent=19 // pred_region
        %s198 = smul.u32 32, %s17
        %p199 = scmp.lt.s32.totalorder %s198, 63
        %s200 = scalar_select %p199, %s198, 63
        %s201 = smul.addr %s200, 8
        %s202 = scalar_lea.vmem %s3, %s201
        %s203 = smul.u32 32, %s17
      $region32: #{_graphsage_forward.3} parent=19 // pred_fallthru
        _
    $region20: #{_graphsage_forward.3} parent=5 // pred_fallthru
      _
    %p204 = scmp.le.s32.totalorder 1, %s10
    %p205 = scmp.lt.s32.totalorder %s10, 3
    %p206 = pnand %p204, %p205
    %p207 = pneg %p206
    // Predicated region
    $region33: #{_graphsage_forward.3} parent=5 // pred_check
      _
    $region34: #{_graphsage_forward.3} parent=5 // pred_check_branch
      %209 = sbr.rel (%p206) target = $region36
    $region35: #{_graphsage_forward.3} parent=5 // pred_region
      %s210 = ssub.s32 %s10, 1
      %s211 = smul.u32 32, %s19
      %s212 = smul.u32 4, %s20
      %p213 = scmp.lt.s32.totalorder %s211, 63
      %s214 = scalar_select %p213, %s211, 63
      %p215 = scmp.lt.s32.totalorder %s212, 3
      %s216 = scalar_select %p215, %s212, 3
      %s217 = smul.addr %s214, 4
      %s218 = sadd.s32 %s216, %s217
      %s219 = smul.addr %s218, 4
      %s220 = scalar_lea.vmem %s0, %s219
      %p221 = pneg %p50
      %p222 = pneg %p47
      %p223 = pneg %p71
      %p224 = pneg %p68
      %s225 = smul.u32 32, %s19
      %p226 = scmp.lt.s32.totalorder %s225, 63
      %s227 = scalar_select %p226, %s225, 63
      %s228 = smul.addr %s227, 8
      %s229 = scalar_lea.vmem %s2, %s228
      %p230 = pneg %p97
      %p231 = pneg %p94
      %s232 = smul.u32 32, %s19
      %p233 = scmp.lt.s32.totalorder %s232, 63
      %s234 = scalar_select %p233, %s232, 63
      %s235 = smul.addr %s234, 8
      %s236 = scalar_lea.vmem %s3, %s235
      %p237 = pneg %p123
      %p238 = pneg %p120
      %p239 = pneg %p149
      %p240 = pneg %p146
      %s241 = smul.u32 32, %s19
      %p242 = scmp.lt.s32.totalorder %s241, 63
      %s243 = scalar_select %p242, %s241, 63
      %s244 = smul.addr %s243, 8
      %s245 = scalar_lea.vmem %s4, %s244
      %s246 = smul.u32 32, %s19
      %s247 = smul.u32 4, %s20
      %p248 = scmp.lt.s32.totalorder %s246, 63
      %s249 = scalar_select %p248, %s246, 63
      %p250 = scmp.lt.s32.totalorder %s247, 3
      %s251 = scalar_select %p250, %s247, 3
      %s252 = smul.addr %s249, 4
      %s253 = sadd.s32 %s251, %s252
      %s254 = smul.addr %s253, 4
      %s255 = scalar_lea.vmem %s0, %s254
      %s256 = smul.u32 32, %s19
      %s257 = smul.u32 4, %s20
      %s258 = smul.u32 32, %s19
      %p259 = scmp.lt.s32.totalorder %s258, 63
      %s260 = scalar_select %p259, %s258, 63
      %s261 = smul.addr %s260, 8
      %s262 = scalar_lea.vmem %s2, %s261
      %s263 = smul.u32 32, %s19
      %s264 = smul.u32 32, %s19
      %p265 = scmp.lt.s32.totalorder %s264, 63
      %s266 = scalar_select %p265, %s264, 63
      %s267 = smul.addr %s266, 8
      %s268 = scalar_lea.vmem %s3, %s267
      %s269 = smul.u32 32, %s19
      %s270 = smul.u32 32, %s19
      %p271 = scmp.lt.s32.totalorder %s270, 63
      %s272 = scalar_select %p271, %s270, 63
      %s273 = smul.addr %s272, 8
      %s274 = scalar_lea.vmem %s4, %s273
      %s275 = smul.u32 32, %s19
      %p277 = scmp.eq.s32.totalorder %s20, 0
      // Predicated region
      $region37: #{_graphsage_forward.3} parent=35 // pred_check
        %p278 = pneg %p277
      $region38: #{_graphsage_forward.3} parent=35 // pred_check_branch
        %280 = sbr.rel (%p278) target = $region40
      $region39: #{_graphsage_forward.3} parent=35 // pred_region
        %281 = vst [vmem:[#allocation2] sm:$0xff] 0.0
        %282 = vst [vmem:[#allocation2 + $0x8] sm:$0xff] 0.0
        %283 = vst [vmem:[#allocation2 + $0x10] sm:$0xff] 0.0
        %284 = vst [vmem:[#allocation2 + $0x18] sm:$0xff] 0.0
        %285 = vst [vmem:[#allocation2 + $0x20] sm:$0xff] 0.0
        %286 = vst [vmem:[#allocation2 + $0x28] sm:$0xff] 0.0
        %287 = vst [vmem:[#allocation2 + $0x30] sm:$0xff] 0.0
        %288 = vst [vmem:[#allocation2 + $0x38] sm:$0xff] 0.0
        %289 = vst [vmem:[#allocation2 + $0x40] sm:$0xff] 0.0
        %290 = vst [vmem:[#allocation2 + $0x48] sm:$0xff] 0.0
        %291 = vst [vmem:[#allocation2 + $0x50] sm:$0xff] 0.0
        %292 = vst [vmem:[#allocation2 + $0x58] sm:$0xff] 0.0
        %293 = vst [vmem:[#allocation2 + $0x60] sm:$0xff] 0.0
        %294 = vst [vmem:[#allocation2 + $0x68] sm:$0xff] 0.0
        %295 = vst [vmem:[#allocation2 + $0x70] sm:$0xff] 0.0
        %296 = vst [vmem:[#allocation2 + $0x78] sm:$0xff] 0.0
        %297 = vst [vmem:[#allocation2 + $0x80] sm:$0xff] 0.0
        %298 = vst [vmem:[#allocation2 + $0x88] sm:$0xff] 0.0
        %299 = vst [vmem:[#allocation2 + $0x90] sm:$0xff] 0.0
        %300 = vst [vmem:[#allocation2 + $0x98] sm:$0xff] 0.0
        %301 = vst [vmem:[#allocation2 + $0xa0] sm:$0xff] 0.0
        %302 = vst [vmem:[#allocation2 + $0xa8] sm:$0xff] 0.0
        %303 = vst [vmem:[#allocation2 + $0xb0] sm:$0xff] 0.0
        %304 = vst [vmem:[#allocation2 + $0xb8] sm:$0xff] 0.0
        %305 = vst [vmem:[#allocation2 + $0xc0] sm:$0xff] 0.0
        %306 = vst [vmem:[#allocation2 + $0xc8] sm:$0xff] 0.0
        %307 = vst [vmem:[#allocation2 + $0xd0] sm:$0xff] 0.0
        %308 = vst [vmem:[#allocation2 + $0xd8] sm:$0xff] 0.0
        %309 = vst [vmem:[#allocation2 + $0xe0] sm:$0xff] 0.0
        %310 = vst [vmem:[#allocation2 + $0xe8] sm:$0xff] 0.0
        %311 = vst [vmem:[#allocation2 + $0xf0] sm:$0xff] 0.0
        %312 = vst [vmem:[#allocation2 + $0xf8] sm:$0xff] 0.0
      $region40: #{_graphsage_forward.3} parent=35 // pred_fallthru
        _
      %s313 = smul.u32 %s20, 512
      %s314 = sshra.s32 %s313, 3
      %s315 = sand.u32 %s313, 7
      %s316 = smul.addr %s314, 4
      %s317 = scalar_lea.vmem %s1, %s316
      %v318 = vld [vmem:[%s317] sm:$0xf]
      %v319 = vld [vmem:[%s317 + $0x4] sm:$0xf]
      %v320 = vld [vmem:[%s317 + $0x8] sm:$0xf]
      %v321 = vld [vmem:[%s317 + $0xc] sm:$0xf]
      %v322 = vld [vmem:[%s317 + $0x10] sm:$0xf]
      %v323 = vld [vmem:[%s317 + $0x14] sm:$0xf]
      %v324 = vld [vmem:[%s317 + $0x18] sm:$0xf]
      %v325 = vld [vmem:[%s317 + $0x1c] sm:$0xf]
      %v326 = vld [vmem:[%s317 + $0x20] sm:$0xf]
      %v327 = vld [vmem:[%s317 + $0x24] sm:$0xf]
      %v328 = vld [vmem:[%s317 + $0x28] sm:$0xf]
      %v329 = vld [vmem:[%s317 + $0x2c] sm:$0xf]
      %v330 = vld [vmem:[%s317 + $0x30] sm:$0xf]
      %v331 = vld [vmem:[%s317 + $0x34] sm:$0xf]
      %v332 = vld [vmem:[%s317 + $0x38] sm:$0xf]
      %v333 = vld [vmem:[%s317 + $0x3c] sm:$0xf]
      %v334 = vld [vmem:[%s317 + $0x40] sm:$0xf]
      %v335 = vld [vmem:[%s317 + $0x44] sm:$0xf]
      %v336 = vld [vmem:[%s317 + $0x48] sm:$0xf]
      %v337 = vld [vmem:[%s317 + $0x4c] sm:$0xf]
      %v338 = vld [vmem:[%s317 + $0x50] sm:$0xf]
      %v339 = vld [vmem:[%s317 + $0x54] sm:$0xf]
      %v340 = vld [vmem:[%s317 + $0x58] sm:$0xf]
      %v341 = vld [vmem:[%s317 + $0x5c] sm:$0xf]
      %v342 = vld [vmem:[%s317 + $0x60] sm:$0xf]
      %v343 = vld [vmem:[%s317 + $0x64] sm:$0xf]
      %v344 = vld [vmem:[%s317 + $0x68] sm:$0xf]
      %v345 = vld [vmem:[%s317 + $0x6c] sm:$0xf]
      %v346 = vld [vmem:[%s317 + $0x70] sm:$0xf]
      %v347 = vld [vmem:[%s317 + $0x74] sm:$0xf]
      %v348 = vld [vmem:[%s317 + $0x78] sm:$0xf]
      %v349 = vld [vmem:[%s317 + $0x7c] sm:$0xf]
      %v350 = vld [vmem:[%s317 + $0x80] sm:$0xf]
      %v351 = vld [vmem:[%s317 + $0x84] sm:$0xf]
      %v352 = vld [vmem:[%s317 + $0x88] sm:$0xf]
      %v353 = vld [vmem:[%s317 + $0x8c] sm:$0xf]
      %v354 = vld [vmem:[%s317 + $0x90] sm:$0xf]
      %v355 = vld [vmem:[%s317 + $0x94] sm:$0xf]
      %v356 = vld [vmem:[%s317 + $0x98] sm:$0xf]
      %v357 = vld [vmem:[%s317 + $0x9c] sm:$0xf]
      %v358 = vld [vmem:[%s317 + $0xa0] sm:$0xf]
      %v359 = vld [vmem:[%s317 + $0xa4] sm:$0xf]
      %v360 = vld [vmem:[%s317 + $0xa8] sm:$0xf]
      %v361 = vld [vmem:[%s317 + $0xac] sm:$0xf]
      %v362 = vld [vmem:[%s317 + $0xb0] sm:$0xf]
      %v363 = vld [vmem:[%s317 + $0xb4] sm:$0xf]
      %v364 = vld [vmem:[%s317 + $0xb8] sm:$0xf]
      %v365 = vld [vmem:[%s317 + $0xbc] sm:$0xf]
      %v366 = vld [vmem:[%s317 + $0xc0] sm:$0xf]
      %v367 = vld [vmem:[%s317 + $0xc4] sm:$0xf]
      %v368 = vld [vmem:[%s317 + $0xc8] sm:$0xf]
      %v369 = vld [vmem:[%s317 + $0xcc] sm:$0xf]
      %v370 = vld [vmem:[%s317 + $0xd0] sm:$0xf]
      %v371 = vld [vmem:[%s317 + $0xd4] sm:$0xf]
      %v372 = vld [vmem:[%s317 + $0xd8] sm:$0xf]
      %v373 = vld [vmem:[%s317 + $0xdc] sm:$0xf]
      %v374 = vld [vmem:[%s317 + $0xe0] sm:$0xf]
      %v375 = vld [vmem:[%s317 + $0xe4] sm:$0xf]
      %v376 = vld [vmem:[%s317 + $0xe8] sm:$0xf]
      %v377 = vld [vmem:[%s317 + $0xec] sm:$0xf]
      %v378 = vld [vmem:[%s317 + $0xf0] sm:$0xf]
      %v379 = vld [vmem:[%s317 + $0xf4] sm:$0xf]
      %v380 = vld [vmem:[%s317 + $0xf8] sm:$0xf]
      %v381 = vld [vmem:[%s317 + $0xfc] sm:$0xf]
      %v382 = vld [vmem:[#allocation2] sm:$0xff]
      %v383 = vld [vmem:[#allocation2 + $0x8] sm:$0xff]
      %v384 = vld [vmem:[#allocation2 + $0x10] sm:$0xff]
      %v385 = vld [vmem:[#allocation2 + $0x18] sm:$0xff]
      %v386 = vld [vmem:[#allocation2 + $0x20] sm:$0xff]
      %v387 = vld [vmem:[#allocation2 + $0x28] sm:$0xff]
      %v388 = vld [vmem:[#allocation2 + $0x30] sm:$0xff]
      %v389 = vld [vmem:[#allocation2 + $0x38] sm:$0xff]
      %v390 = vld [vmem:[#allocation2 + $0x40] sm:$0xff]
      %v391 = vld [vmem:[#allocation2 + $0x48] sm:$0xff]
      %v392 = vld [vmem:[#allocation2 + $0x50] sm:$0xff]
      %v393 = vld [vmem:[#allocation2 + $0x58] sm:$0xff]
      %v394 = vld [vmem:[#allocation2 + $0x60] sm:$0xff]
      %v395 = vld [vmem:[#allocation2 + $0x68] sm:$0xff]
      %v396 = vld [vmem:[#allocation2 + $0x70] sm:$0xff]
      %v397 = vld [vmem:[#allocation2 + $0x78] sm:$0xff]
      %v398 = vld [vmem:[#allocation2 + $0x80] sm:$0xff]
      %v399 = vld [vmem:[#allocation2 + $0x88] sm:$0xff]
      %v400 = vld [vmem:[#allocation2 + $0x90] sm:$0xff]
      %v401 = vld [vmem:[#allocation2 + $0x98] sm:$0xff]
      %v402 = vld [vmem:[#allocation2 + $0xa0] sm:$0xff]
      %v403 = vld [vmem:[#allocation2 + $0xa8] sm:$0xff]
      %v404 = vld [vmem:[#allocation2 + $0xb0] sm:$0xff]
      %v405 = vld [vmem:[#allocation2 + $0xb8] sm:$0xff]
      %v406 = vld [vmem:[#allocation2 + $0xc0] sm:$0xff]
      %v407 = vld [vmem:[#allocation2 + $0xc8] sm:$0xff]
      %v408 = vld [vmem:[#allocation2 + $0xd0] sm:$0xff]
      %v409 = vld [vmem:[#allocation2 + $0xd8] sm:$0xff]
      %v410 = vld [vmem:[#allocation2 + $0xe0] sm:$0xff]
      %v411 = vld [vmem:[#allocation2 + $0xe8] sm:$0xff]
      %v412 = vld [vmem:[#allocation2 + $0xf0] sm:$0xff]
      %v413 = vld [vmem:[#allocation2 + $0xf8] sm:$0xff]
      %v414 = vld [vmem:[%s255] sm:$0xff]
      %v415 = vld [vmem:[%s255 + $0x8] sm:$0xff]
      %v416 = vld [vmem:[%s255 + $0x10] sm:$0xff]
      %v417 = vld [vmem:[%s255 + $0x18] sm:$0xff]
      %v418 = vld [vmem:[%s255 + $0x20] sm:$0xff]
      %v419 = vld [vmem:[%s255 + $0x28] sm:$0xff]
      %v420 = vld [vmem:[%s255 + $0x30] sm:$0xff]
      %v421 = vld [vmem:[%s255 + $0x38] sm:$0xff]
      %v422 = vld [vmem:[%s255 + $0x40] sm:$0xff]
      %v423 = vld [vmem:[%s255 + $0x48] sm:$0xff]
      %v424 = vld [vmem:[%s255 + $0x50] sm:$0xff]
      %v425 = vld [vmem:[%s255 + $0x58] sm:$0xff]
      %v426 = vld [vmem:[%s255 + $0x60] sm:$0xff]
      %v427 = vld [vmem:[%s255 + $0x68] sm:$0xff]
      %v428 = vld [vmem:[%s255 + $0x70] sm:$0xff]
      %v429 = vld [vmem:[%s255 + $0x78] sm:$0xff]
      %v430 = vld [vmem:[%s255 + $0x80] sm:$0xff]
      %v431 = vld [vmem:[%s255 + $0x88] sm:$0xff]
      %v432 = vld [vmem:[%s255 + $0x90] sm:$0xff]
      %v433 = vld [vmem:[%s255 + $0x98] sm:$0xff]
      %v434 = vld [vmem:[%s255 + $0xa0] sm:$0xff]
      %v435 = vld [vmem:[%s255 + $0xa8] sm:$0xff]
      %v436 = vld [vmem:[%s255 + $0xb0] sm:$0xff]
      %v437 = vld [vmem:[%s255 + $0xb8] sm:$0xff]
      %v438 = vld [vmem:[%s255 + $0xc0] sm:$0xff]
      %v439 = vld [vmem:[%s255 + $0xc8] sm:$0xff]
      %v440 = vld [vmem:[%s255 + $0xd0] sm:$0xff]
      %v441 = vld [vmem:[%s255 + $0xd8] sm:$0xff]
      %v442 = vld [vmem:[%s255 + $0xe0] sm:$0xff]
      %v443 = vld [vmem:[%s255 + $0xe8] sm:$0xff]
      %v444 = vld [vmem:[%s255 + $0xf0] sm:$0xff]
      %v445 = vld [vmem:[%s255 + $0xf8] sm:$0xff]
      %v446 = vld [vmem:[%s255 + $0x100] sm:$0xff]
      %v447 = vld [vmem:[%s255 + $0x108] sm:$0xff]
      %v448 = vld [vmem:[%s255 + $0x110] sm:$0xff]
      %v449 = vld [vmem:[%s255 + $0x118] sm:$0xff]
      %v450 = vld [vmem:[%s255 + $0x120] sm:$0xff]
      %v451 = vld [vmem:[%s255 + $0x128] sm:$0xff]
      %v452 = vld [vmem:[%s255 + $0x130] sm:$0xff]
      %v453 = vld [vmem:[%s255 + $0x138] sm:$0xff]
      %v454 = vld [vmem:[%s255 + $0x140] sm:$0xff]
      %v455 = vld [vmem:[%s255 + $0x148] sm:$0xff]
      %v456 = vld [vmem:[%s255 + $0x150] sm:$0xff]
      %v457 = vld [vmem:[%s255 + $0x158] sm:$0xff]
      %v458 = vld [vmem:[%s255 + $0x160] sm:$0xff]
      %v459 = vld [vmem:[%s255 + $0x168] sm:$0xff]
      %v460 = vld [vmem:[%s255 + $0x170] sm:$0xff]
      %v461 = vld [vmem:[%s255 + $0x178] sm:$0xff]
      %v462 = vld [vmem:[%s255 + $0x180] sm:$0xff]
      %v463 = vld [vmem:[%s255 + $0x188] sm:$0xff]
      %v464 = vld [vmem:[%s255 + $0x190] sm:$0xff]
      %v465 = vld [vmem:[%s255 + $0x198] sm:$0xff]
      %v466 = vld [vmem:[%s255 + $0x1a0] sm:$0xff]
      %v467 = vld [vmem:[%s255 + $0x1a8] sm:$0xff]
      %v468 = vld [vmem:[%s255 + $0x1b0] sm:$0xff]
      %v469 = vld [vmem:[%s255 + $0x1b8] sm:$0xff]
      %v470 = vld [vmem:[%s255 + $0x1c0] sm:$0xff]
      %v471 = vld [vmem:[%s255 + $0x1c8] sm:$0xff]
      %v472 = vld [vmem:[%s255 + $0x1d0] sm:$0xff]
      %v473 = vld [vmem:[%s255 + $0x1d8] sm:$0xff]
      %v474 = vld [vmem:[%s255 + $0x1e0] sm:$0xff]
      %v475 = vld [vmem:[%s255 + $0x1e8] sm:$0xff]
      %v476 = vld [vmem:[%s255 + $0x1f0] sm:$0xff]
      %v477 = vld [vmem:[%s255 + $0x1f8] sm:$0xff]
      %v542 = vunpack.c.l.b16 %v414
      %v543 = vunpack.c.h.b16 %v414
      %v544 = vunpack.c.l.b16 %v415
      %v545 = vunpack.c.h.b16 %v415
      %v546 = vunpack.c.l.b16 %v416
      %v547 = vunpack.c.h.b16 %v416
      %v548 = vunpack.c.l.b16 %v417
      %v549 = vunpack.c.h.b16 %v417
      %v550 = vunpack.c.l.b16 %v418
      %v551 = vunpack.c.h.b16 %v418
      %v552 = vunpack.c.l.b16 %v419
      %v553 = vunpack.c.h.b16 %v419
      %v554 = vunpack.c.l.b16 %v420
      %v555 = vunpack.c.h.b16 %v420
      %v556 = vunpack.c.l.b16 %v421
      %v557 = vunpack.c.h.b16 %v421
      %v558 = vunpack.c.l.b16 %v422
      %v559 = vunpack.c.h.b16 %v422
      %v560 = vunpack.c.l.b16 %v423
      %v561 = vunpack.c.h.b16 %v423
      %v562 = vunpack.c.l.b16 %v424
      %v563 = vunpack.c.h.b16 %v424
      %v564 = vunpack.c.l.b16 %v425
      %v565 = vunpack.c.h.b16 %v425
      %v566 = vunpack.c.l.b16 %v426
      %v567 = vunpack.c.h.b16 %v426
      %v568 = vunpack.c.l.b16 %v427
      %v569 = vunpack.c.h.b16 %v427
      %v570 = vunpack.c.l.b16 %v428
      %v571 = vunpack.c.h.b16 %v428
      %v572 = vunpack.c.l.b16 %v429
      %v573 = vunpack.c.h.b16 %v429
      %v574 = vunpack.c.l.b16 %v430
      %v575 = vunpack.c.h.b16 %v430
      %v576 = vunpack.c.l.b16 %v431
      %v577 = vunpack.c.h.b16 %v431
      %v578 = vunpack.c.l.b16 %v432
      %v579 = vunpack.c.h.b16 %v432
      %v580 = vunpack.c.l.b16 %v433
      %v581 = vunpack.c.h.b16 %v433
      %v582 = vunpack.c.l.b16 %v434
      %v583 = vunpack.c.h.b16 %v434
      %v584 = vunpack.c.l.b16 %v435
      %v585 = vunpack.c.h.b16 %v435
      %v586 = vunpack.c.l.b16 %v436
      %v587 = vunpack.c.h.b16 %v436
      %v588 = vunpack.c.l.b16 %v437
      %v589 = vunpack.c.h.b16 %v437
      %v590 = vunpack.c.l.b16 %v438
      %v591 = vunpack.c.h.b16 %v438
      %v592 = vunpack.c.l.b16 %v439
      %v593 = vunpack.c.h.b16 %v439
      %v594 = vunpack.c.l.b16 %v440
      %v595 = vunpack.c.h.b16 %v440
      %v596 = vunpack.c.l.b16 %v441
      %v597 = vunpack.c.h.b16 %v441
      %v598 = vunpack.c.l.b16 %v442
      %v599 = vunpack.c.h.b16 %v442
      %v600 = vunpack.c.l.b16 %v443
      %v601 = vunpack.c.h.b16 %v443
      %v602 = vunpack.c.l.b16 %v444
      %v603 = vunpack.c.h.b16 %v444
      %v604 = vunpack.c.l.b16 %v445
      %v605 = vunpack.c.h.b16 %v445
      %v606 = vunpack.c.l.b16 %v446
      %v607 = vunpack.c.h.b16 %v446
      %v608 = vunpack.c.l.b16 %v447
      %v609 = vunpack.c.h.b16 %v447
      %v610 = vunpack.c.l.b16 %v448
      %v611 = vunpack.c.h.b16 %v448
      %v612 = vunpack.c.l.b16 %v449
      %v613 = vunpack.c.h.b16 %v449
      %v614 = vunpack.c.l.b16 %v450
      %v615 = vunpack.c.h.b16 %v450
      %v616 = vunpack.c.l.b16 %v451
      %v617 = vunpack.c.h.b16 %v451
      %v618 = vunpack.c.l.b16 %v452
      %v619 = vunpack.c.h.b16 %v452
      %v620 = vunpack.c.l.b16 %v453
      %v621 = vunpack.c.h.b16 %v453
      %v622 = vunpack.c.l.b16 %v454
      %v623 = vunpack.c.h.b16 %v454
      %v624 = vunpack.c.l.b16 %v455
      %v625 = vunpack.c.h.b16 %v455
      %v626 = vunpack.c.l.b16 %v456
      %v627 = vunpack.c.h.b16 %v456
      %v628 = vunpack.c.l.b16 %v457
      %v629 = vunpack.c.h.b16 %v457
      %v630 = vunpack.c.l.b16 %v458
      %v631 = vunpack.c.h.b16 %v458
      %v632 = vunpack.c.l.b16 %v459
      %v633 = vunpack.c.h.b16 %v459
      %v634 = vunpack.c.l.b16 %v460
      %v635 = vunpack.c.h.b16 %v460
      %v636 = vunpack.c.l.b16 %v461
      %v637 = vunpack.c.h.b16 %v461
      %v638 = vunpack.c.l.b16 %v462
      %v639 = vunpack.c.h.b16 %v462
      %v640 = vunpack.c.l.b16 %v463
      %v641 = vunpack.c.h.b16 %v463
      %v642 = vunpack.c.l.b16 %v464
      %v643 = vunpack.c.h.b16 %v464
      %v644 = vunpack.c.l.b16 %v465
      %v645 = vunpack.c.h.b16 %v465
      %v646 = vunpack.c.l.b16 %v466
      %v647 = vunpack.c.h.b16 %v466
      %v648 = vunpack.c.l.b16 %v467
      %v649 = vunpack.c.h.b16 %v467
      %v650 = vunpack.c.l.b16 %v468
      %v651 = vunpack.c.h.b16 %v468
      %v652 = vunpack.c.l.b16 %v469
      %v653 = vunpack.c.h.b16 %v469
      %v654 = vunpack.c.l.b16 %v470
      %v655 = vunpack.c.h.b16 %v470
      %v656 = vunpack.c.l.b16 %v471
      %v657 = vunpack.c.h.b16 %v471
      %v658 = vunpack.c.l.b16 %v472
      %v659 = vunpack.c.h.b16 %v472
      %v660 = vunpack.c.l.b16 %v473
      %v661 = vunpack.c.h.b16 %v473
      %v662 = vunpack.c.l.b16 %v474
      %v663 = vunpack.c.h.b16 %v474
      %v664 = vunpack.c.l.b16 %v475
      %v665 = vunpack.c.h.b16 %v475
      %v666 = vunpack.c.l.b16 %v476
      %v667 = vunpack.c.h.b16 %v476
      %v668 = vunpack.c.l.b16 %v477
      %v669 = vunpack.c.h.b16 %v477
      %v670 = vpack.c.b16 %v546, %v542
      %v671 = vpack.c.b16 %v547, %v543
      %v672 = vpack.c.b16 %v548, %v544
      %v673 = vpack.c.b16 %v549, %v545
      %v674 = vpack.c.b16 %v554, %v550
      %v675 = vpack.c.b16 %v555, %v551
      %v676 = vpack.c.b16 %v556, %v552
      %v677 = vpack.c.b16 %v557, %v553
      %v678 = vpack.c.b16 %v562, %v558
      %v679 = vpack.c.b16 %v563, %v559
      %v680 = vpack.c.b16 %v564, %v560
      %v681 = vpack.c.b16 %v565, %v561
      %v682 = vpack.c.b16 %v570, %v566
      %v683 = vpack.c.b16 %v571, %v567
      %v684 = vpack.c.b16 %v572, %v568
      %v685 = vpack.c.b16 %v573, %v569
      %v686 = vpack.c.b16 %v578, %v574
      %v687 = vpack.c.b16 %v579, %v575
      %v688 = vpack.c.b16 %v580, %v576
      %v689 = vpack.c.b16 %v581, %v577
      %v690 = vpack.c.b16 %v586, %v582
      %v691 = vpack.c.b16 %v587, %v583
      %v692 = vpack.c.b16 %v588, %v584
      %v693 = vpack.c.b16 %v589, %v585
      %v694 = vpack.c.b16 %v594, %v590
      %v695 = vpack.c.b16 %v595, %v591
      %v696 = vpack.c.b16 %v596, %v592
      %v697 = vpack.c.b16 %v597, %v593
      %v698 = vpack.c.b16 %v602, %v598
      %v699 = vpack.c.b16 %v603, %v599
      %v700 = vpack.c.b16 %v604, %v600
      %v701 = vpack.c.b16 %v605, %v601
      %v702 = vpack.c.b16 %v610, %v606
      %v703 = vpack.c.b16 %v611, %v607
      %v704 = vpack.c.b16 %v612, %v608
      %v705 = vpack.c.b16 %v613, %v609
      %v706 = vpack.c.b16 %v618, %v614
      %v707 = vpack.c.b16 %v619, %v615
      %v708 = vpack.c.b16 %v620, %v616
      %v709 = vpack.c.b16 %v621, %v617
      %v710 = vpack.c.b16 %v626, %v622
      %v711 = vpack.c.b16 %v627, %v623
      %v712 = vpack.c.b16 %v628, %v624
      %v713 = vpack.c.b16 %v629, %v625
      %v714 = vpack.c.b16 %v634, %v630
      %v715 = vpack.c.b16 %v635, %v631
      %v716 = vpack.c.b16 %v636, %v632
      %v717 = vpack.c.b16 %v637, %v633
      %v718 = vpack.c.b16 %v642, %v638
      %v719 = vpack.c.b16 %v643, %v639
      %v720 = vpack.c.b16 %v644, %v640
      %v721 = vpack.c.b16 %v645, %v641
      %v722 = vpack.c.b16 %v650, %v646
      %v723 = vpack.c.b16 %v651, %v647
      %v724 = vpack.c.b16 %v652, %v648
      %v725 = vpack.c.b16 %v653, %v649
      %v726 = vpack.c.b16 %v658, %v654
      %v727 = vpack.c.b16 %v659, %v655
      %v728 = vpack.c.b16 %v660, %v656
      %v729 = vpack.c.b16 %v661, %v657
      %v730 = vpack.c.b16 %v666, %v662
      %v731 = vpack.c.b16 %v667, %v663
      %v732 = vpack.c.b16 %v668, %v664
      %v733 = vpack.c.b16 %v669, %v665
      %v862 = vunpack.c.l.b16 %v318
      %v863 = vunpack.c.l.b16 %v319
      %v864 = vunpack.c.l.b16 %v320
      %v865 = vunpack.c.l.b16 %v321
      %v866 = vunpack.c.l.b16 %v322
      %v867 = vunpack.c.l.b16 %v323
      %v868 = vunpack.c.l.b16 %v324
      %v869 = vunpack.c.l.b16 %v325
      %v870 = vunpack.c.l.b16 %v326
      %v871 = vunpack.c.l.b16 %v327
      %v872 = vunpack.c.l.b16 %v328
      %v873 = vunpack.c.l.b16 %v329
      %v874 = vunpack.c.l.b16 %v330
      %v875 = vunpack.c.l.b16 %v331
      %v876 = vunpack.c.l.b16 %v332
      %v877 = vunpack.c.l.b16 %v333
      %v878 = vunpack.c.l.b16 %v334
      %v879 = vunpack.c.l.b16 %v335
      %v880 = vunpack.c.l.b16 %v336
      %v881 = vunpack.c.l.b16 %v337
      %v882 = vunpack.c.l.b16 %v338
      %v883 = vunpack.c.l.b16 %v339
      %v884 = vunpack.c.l.b16 %v340
      %v885 = vunpack.c.l.b16 %v341
      %v886 = vunpack.c.l.b16 %v342
      %v887 = vunpack.c.l.b16 %v343
      %v888 = vunpack.c.l.b16 %v344
      %v889 = vunpack.c.l.b16 %v345
      %v890 = vunpack.c.l.b16 %v346
      %v891 = vunpack.c.l.b16 %v347
      %v892 = vunpack.c.l.b16 %v348
      %v893 = vunpack.c.l.b16 %v349
      %v894 = vunpack.c.l.b16 %v350
      %v895 = vunpack.c.l.b16 %v351
      %v896 = vunpack.c.l.b16 %v352
      %v897 = vunpack.c.l.b16 %v353
      %v898 = vunpack.c.l.b16 %v354
      %v899 = vunpack.c.l.b16 %v355
      %v900 = vunpack.c.l.b16 %v356
      %v901 = vunpack.c.l.b16 %v357
      %v902 = vunpack.c.l.b16 %v358
      %v903 = vunpack.c.l.b16 %v359
      %v904 = vunpack.c.l.b16 %v360
      %v905 = vunpack.c.l.b16 %v361
      %v906 = vunpack.c.l.b16 %v362
      %v907 = vunpack.c.l.b16 %v363
      %v908 = vunpack.c.l.b16 %v364
      %v909 = vunpack.c.l.b16 %v365
      %v910 = vunpack.c.l.b16 %v366
      %v911 = vunpack.c.l.b16 %v367
      %v912 = vunpack.c.l.b16 %v368
      %v913 = vunpack.c.l.b16 %v369
      %v914 = vunpack.c.l.b16 %v370
      %v915 = vunpack.c.l.b16 %v371
      %v916 = vunpack.c.l.b16 %v372
      %v917 = vunpack.c.l.b16 %v373
      %v918 = vunpack.c.l.b16 %v374
      %v919 = vunpack.c.l.b16 %v375
      %v920 = vunpack.c.l.b16 %v376
      %v921 = vunpack.c.l.b16 %v377
      %v922 = vunpack.c.l.b16 %v378
      %v923 = vunpack.c.l.b16 %v379
      %v924 = vunpack.c.l.b16 %v380
      %v925 = vunpack.c.l.b16 %v381
      %v926 = vpack.c.b16 %v863, %v862
      %v927 = vpack.c.b16 %v865, %v864
      %v928 = vpack.c.b16 %v867, %v866
      %v929 = vpack.c.b16 %v869, %v868
      %v930 = vpack.c.b16 %v871, %v870
      %v931 = vpack.c.b16 %v873, %v872
      %v932 = vpack.c.b16 %v875, %v874
      %v933 = vpack.c.b16 %v877, %v876
      %v934 = vpack.c.b16 %v879, %v878
      %v935 = vpack.c.b16 %v881, %v880
      %v936 = vpack.c.b16 %v883, %v882
      %v937 = vpack.c.b16 %v885, %v884
      %v938 = vpack.c.b16 %v887, %v886
      %v939 = vpack.c.b16 %v889, %v888
      %v940 = vpack.c.b16 %v891, %v890
      %v941 = vpack.c.b16 %v893, %v892
      %v942 = vpack.c.b16 %v895, %v894
      %v943 = vpack.c.b16 %v897, %v896
      %v944 = vpack.c.b16 %v899, %v898
      %v945 = vpack.c.b16 %v901, %v900
      %v946 = vpack.c.b16 %v903, %v902
      %v947 = vpack.c.b16 %v905, %v904
      %v948 = vpack.c.b16 %v907, %v906
      %v949 = vpack.c.b16 %v909, %v908
      %v950 = vpack.c.b16 %v911, %v910
      %v951 = vpack.c.b16 %v913, %v912
      %v952 = vpack.c.b16 %v915, %v914
      %v953 = vpack.c.b16 %v917, %v916
      %v954 = vpack.c.b16 %v919, %v918
      %v955 = vpack.c.b16 %v921, %v920
      %v956 = vpack.c.b16 %v923, %v922
      %v957 = vpack.c.b16 %v925, %v924
      %990 = vmatprep.subr.bf16.mxu0 0
      %991 = vmatpush1.bf16.msra.mxu0 %v926
      %992 = vmatprep.subr.bf16.mxu0 0
      %993 = vmatpush1.bf16.msra.mxu0 %v927
      %994 = vmatprep.subr.bf16.mxu0 0
      %995 = vmatpush1.bf16.msra.mxu0 %v928
      %996 = vmatprep.subr.bf16.mxu0 0
      %997 = vmatpush1.bf16.msra.mxu0 %v929
      %998 = vmatprep.subr.bf16.mxu0 0
      %999 = vmatpush1.bf16.msra.mxu0 %v930
      %1000 = vmatprep.subr.bf16.mxu0 0
      %1001 = vmatpush1.bf16.msra.mxu0 %v931
      %1002 = vmatprep.subr.bf16.mxu0 0
      %1003 = vmatpush1.bf16.msra.mxu0 %v932
      %1004 = vmatprep.subr.bf16.mxu0 0
      %1005 = vmatpush1.bf16.msra.mxu0 %v933
      %1006 = vmatprep.subr.bf16.mxu0 0
      %1007 = vmatpush1.bf16.msra.mxu0 %v934
      %1008 = vmatprep.subr.bf16.mxu0 0
      %1009 = vmatpush1.bf16.msra.mxu0 %v935
      %1010 = vmatprep.subr.bf16.mxu0 0
      %1011 = vmatpush1.bf16.msra.mxu0 %v936
      %1012 = vmatprep.subr.bf16.mxu0 0
      %1013 = vmatpush1.bf16.msra.mxu0 %v937
      %1014 = vmatprep.subr.bf16.mxu0 0
      %1015 = vmatpush1.bf16.msra.mxu0 %v938
      %1016 = vmatprep.subr.bf16.mxu0 0
      %1017 = vmatpush1.bf16.msra.mxu0 %v939
      %1018 = vmatprep.subr.bf16.mxu0 0
      %1019 = vmatpush1.bf16.msra.mxu0 %v940
      %1020 = vmatprep.subr.bf16.mxu0 0
      %1021 = vmatpush1.bf16.msra.mxu0 %v941
      %1022 = vmatprep.mubr.bf16.mxu0 %v671
      %1023 = vmatmul.mubr.bf16.gmra.mrb[0].mxu0 %v670
      %v1024 = vpop.f32.mrb[0].mxu0
      %v1025 = vadd.f32 0.0, %v1024
      %v1026 = vpop.f32.mrb[0].mxu0
      %v1027 = vpop.f32.mrb[0].mxu0
      %v1028 = vadd.f32 0.0, %v1027
      %v1029 = vpop.f32.mrb[0].mxu0
      %1030 = vmatprep.mubr.bf16.mxu0 %v675
      %1031 = vmatmul.mubr.bf16.gmra.mrb[0].mxu0 %v674
      %v1032 = vpop.f32.mrb[0].mxu0
      %v1033 = vadd.f32 0.0, %v1032
      %v1034 = vpop.f32.mrb[0].mxu0
      %v1035 = vpop.f32.mrb[0].mxu0
      %v1036 = vadd.f32 0.0, %v1035
      %v1037 = vpop.f32.mrb[0].mxu0
      %1038 = vmatprep.mubr.bf16.mxu0 %v679
      %1039 = vmatmul.mubr.bf16.gmra.mrb[0].mxu0 %v678
      %v1040 = vpop.f32.mrb[0].mxu0
      %v1041 = vadd.f32 0.0, %v1040
      %v1042 = vpop.f32.mrb[0].mxu0
      %v1043 = vpop.f32.mrb[0].mxu0
      %v1044 = vadd.f32 0.0, %v1043
      %v1045 = vpop.f32.mrb[0].mxu0
      %1046 = vmatprep.mubr.bf16.mxu0 %v683
      %1047 = vmatmul.mubr.bf16.gmra.mrb[0].mxu0 %v682
      %v1048 = vpop.f32.mrb[0].mxu0
      %v1049 = vadd.f32 0.0, %v1048
      %v1050 = vpop.f32.mrb[0].mxu0
      %v1051 = vpop.f32.mrb[0].mxu0
      %v1052 = vadd.f32 0.0, %v1051
      %v1053 = vpop.f32.mrb[0].mxu0
      %1054 = vmatprep.mubr.bf16.mxu0 %v687
      %1055 = vmatmul.mubr.bf16.gmra.mrb[0].mxu0 %v686
      %v1056 = vpop.f32.mrb[0].mxu0
      %v1057 = vadd.f32 0.0, %v1056
      %v1058 = vpop.f32.mrb[0].mxu0
      %v1059 = vpop.f32.mrb[0].mxu0
      %v1060 = vadd.f32 0.0, %v1059
      %v1061 = vpop.f32.mrb[0].mxu0
      %1062 = vmatprep.mubr.bf16.mxu0 %v691
      %1063 = vmatmul.mubr.bf16.gmra.mrb[0].mxu0 %v690
      %v1064 = vpop.f32.mrb[0].mxu0
      %v1065 = vadd.f32 0.0, %v1064
      %v1066 = vpop.f32.mrb[0].mxu0
      %v1067 = vpop.f32.mrb[0].mxu0
      %v1068 = vadd.f32 0.0, %v1067
      %v1069 = vpop.f32.mrb[0].mxu0
      %1070 = vmatprep.mubr.bf16.mxu0 %v695
      %1071 = vmatmul.mubr.bf16.gmra.mrb[0].mxu0 %v694
      %v1072 = vpop.f32.mrb[0].mxu0
      %v1073 = vadd.f32 0.0, %v1072
      %v1074 = vpop.f32.mrb[0].mxu0
      %v1075 = vpop.f32.mrb[0].mxu0
      %v1076 = vadd.f32 0.0, %v1075
      %v1077 = vpop.f32.mrb[0].mxu0
      %1078 = vmatprep.mubr.bf16.mxu0 %v699
      %1079 = vmatmul.mubr.bf16.gmra.mrb[0].mxu0 %v698
      %v1080 = vpop.f32.mrb[0].mxu0
      %v1081 = vadd.f32 0.0, %v1080
      %v1082 = vpop.f32.mrb[0].mxu0
      %v1083 = vpop.f32.mrb[0].mxu0
      %v1084 = vadd.f32 0.0, %v1083
      %v1085 = vpop.f32.mrb[0].mxu0
      %1086 = vmatprep.mubr.bf16.mxu0 %v703
      %1087 = vmatmul.mubr.bf16.gmra.mrb[0].mxu0 %v702
      %v1088 = vpop.f32.mrb[0].mxu0
      %v1089 = vadd.f32 0.0, %v1088
      %v1090 = vpop.f32.mrb[0].mxu0
      %v1091 = vpop.f32.mrb[0].mxu0
      %v1092 = vadd.f32 0.0, %v1091
      %v1093 = vpop.f32.mrb[0].mxu0
      %1094 = vmatprep.mubr.bf16.mxu0 %v707
      %1095 = vmatmul.mubr.bf16.gmra.mrb[0].mxu0 %v706
      %v1096 = vpop.f32.mrb[0].mxu0
      %v1097 = vadd.f32 0.0, %v1096
      %v1098 = vpop.f32.mrb[0].mxu0
      %v1099 = vpop.f32.mrb[0].mxu0
      %v1100 = vadd.f32 0.0, %v1099
      %v1101 = vpop.f32.mrb[0].mxu0
      %1102 = vmatprep.mubr.bf16.mxu0 %v711
      %1103 = vmatmul.mubr.bf16.gmra.mrb[0].mxu0 %v710
      %v1104 = vpop.f32.mrb[0].mxu0
      %v1105 = vadd.f32 0.0, %v1104
      %v1106 = vpop.f32.mrb[0].mxu0
      %v1107 = vpop.f32.mrb[0].mxu0
      %v1108 = vadd.f32 0.0, %v1107
      %v1109 = vpop.f32.mrb[0].mxu0
      %1110 = vmatprep.mubr.bf16.mxu0 %v715
      %1111 = vmatmul.mubr.bf16.gmra.mrb[0].mxu0 %v714
      %v1112 = vpop.f32.mrb[0].mxu0
      %v1113 = vadd.f32 0.0, %v1112
      %v1114 = vpop.f32.mrb[0].mxu0
      %v1115 = vpop.f32.mrb[0].mxu0
      %v1116 = vadd.f32 0.0, %v1115
      %v1117 = vpop.f32.mrb[0].mxu0
      %1118 = vmatprep.mubr.bf16.mxu0 %v719
      %1119 = vmatmul.mubr.bf16.gmra.mrb[0].mxu0 %v718
      %v1120 = vpop.f32.mrb[0].mxu0
      %v1121 = vadd.f32 0.0, %v1120
      %v1122 = vpop.f32.mrb[0].mxu0
      %v1123 = vpop.f32.mrb[0].mxu0
      %v1124 = vadd.f32 0.0, %v1123
      %v1125 = vpop.f32.mrb[0].mxu0
      %1126 = vmatprep.mubr.bf16.mxu0 %v723
      %1127 = vmatmul.mubr.bf16.gmra.mrb[0].mxu0 %v722
      %v1128 = vpop.f32.mrb[0].mxu0
      %v1129 = vadd.f32 0.0, %v1128
      %v1130 = vpop.f32.mrb[0].mxu0
      %v1131 = vpop.f32.mrb[0].mxu0
      %v1132 = vadd.f32 0.0, %v1131
      %v1133 = vpop.f32.mrb[0].mxu0
      %1134 = vmatprep.mubr.bf16.mxu0 %v727
      %1135 = vmatmul.mubr.bf16.gmra.mrb[0].mxu0 %v726
      %v1136 = vpop.f32.mrb[0].mxu0
      %v1137 = vadd.f32 0.0, %v1136
      %v1138 = vpop.f32.mrb[0].mxu0
      %v1139 = vpop.f32.mrb[0].mxu0
      %v1140 = vadd.f32 0.0, %v1139
      %v1141 = vpop.f32.mrb[0].mxu0
      %1142 = vmatprep.mubr.bf16.mxu0 %v731
      %1143 = vmatmul.mubr.bf16.gmra.mrb[0].mxu0 %v730
      %v1144 = vpop.f32.mrb[0].mxu0
      %v1145 = vadd.f32 0.0, %v1144
      %v1146 = vpop.f32.mrb[0].mxu0
      %v1147 = vpop.f32.mrb[0].mxu0
      %v1148 = vadd.f32 0.0, %v1147
      %v1149 = vpop.f32.mrb[0].mxu0
      %1150 = vdwg.mxu0
      %1151 = vmatprep.subr.bf16.mxu0 0
      %1152 = vmatpush1.bf16.msra.mxu0 %v942
      %1153 = vmatprep.subr.bf16.mxu0 0
      %1154 = vmatpush1.bf16.msra.mxu0 %v943
      %1155 = vmatprep.subr.bf16.mxu0 0
      %1156 = vmatpush1.bf16.msra.mxu0 %v944
      %1157 = vmatprep.subr.bf16.mxu0 0
      %1158 = vmatpush1.bf16.msra.mxu0 %v945
      %1159 = vmatprep.subr.bf16.mxu0 0
      %1160 = vmatpush1.bf16.msra.mxu0 %v946
      %1161 = vmatprep.subr.bf16.mxu0 0
      %1162 = vmatpush1.bf16.msra.mxu0 %v947
      %1163 = vmatprep.subr.bf16.mxu0 0
      %1164 = vmatpush1.bf16.msra.mxu0 %v948
      %1165 = vmatprep.subr.bf16.mxu0 0
      %1166 = vmatpush1.bf16.msra.mxu0 %v949
      %1167 = vmatprep.subr.bf16.mxu0 0
      %1168 = vmatpush1.bf16.msra.mxu0 %v950
      %1169 = vmatprep.subr.bf16.mxu0 0
      %1170 = vmatpush1.bf16.msra.mxu0 %v951
      %1171 = vmatprep.subr.bf16.mxu0 0
      %1172 = vmatpush1.bf16.msra.mxu0 %v952
      %1173 = vmatprep.subr.bf16.mxu0 0
      %1174 = vmatpush1.bf16.msra.mxu0 %v953
      %1175 = vmatprep.subr.bf16.mxu0 0
      %1176 = vmatpush1.bf16.msra.mxu0 %v954
      %1177 = vmatprep.subr.bf16.mxu0 0
      %1178 = vmatpush1.bf16.msra.mxu0 %v955
      %1179 = vmatprep.subr.bf16.mxu0 0
      %1180 = vmatpush1.bf16.msra.mxu0 %v956
      %1181 = vmatprep.subr.bf16.mxu0 0
      %1182 = vmatpush1.bf16.msra.mxu0 %v957
      %1183 = vmatprep.mubr.bf16.mxu0 %v673
      %1184 = vmatmul.mubr.bf16.gmra.mrb[0].mxu0 %v672
      %v1185 = vpop.f32.mrb[0].mxu0
      %v1186 = vadd.f32 %v1025, %v1185
      %v1187 = vpop.f32.mrb[0].mxu0
      %v1188 = vpop.f32.mrb[0].mxu0
      %v1189 = vadd.f32 %v1028, %v1188
      %v1190 = vpop.f32.mrb[0].mxu0
      %1191 = vmatprep.mubr.bf16.mxu0 %v677
      %1192 = vmatmul.mubr.bf16.gmra.mrb[0].mxu0 %v676
      %v1193 = vpop.f32.mrb[0].mxu0
      %v1194 = vadd.f32 %v1033, %v1193
      %v1195 = vpop.f32.mrb[0].mxu0
      %v1196 = vpop.f32.mrb[0].mxu0
      %v1197 = vadd.f32 %v1036, %v1196
      %v1198 = vpop.f32.mrb[0].mxu0
      %1199 = vmatprep.mubr.bf16.mxu0 %v681
      %1200 = vmatmul.mubr.bf16.gmra.mrb[0].mxu0 %v680
      %v1201 = vpop.f32.mrb[0].mxu0
      %v1202 = vadd.f32 %v1041, %v1201
      %v1203 = vpop.f32.mrb[0].mxu0
      %v1204 = vpop.f32.mrb[0].mxu0
      %v1205 = vadd.f32 %v1044, %v1204
      %v1206 = vpop.f32.mrb[0].mxu0
      %1207 = vmatprep.mubr.bf16.mxu0 %v685
      %1208 = vmatmul.mubr.bf16.gmra.mrb[0].mxu0 %v684
      %v1209 = vpop.f32.mrb[0].mxu0
      %v1210 = vadd.f32 %v1049, %v1209
      %v1211 = vpop.f32.mrb[0].mxu0
      %v1212 = vpop.f32.mrb[0].mxu0
      %v1213 = vadd.f32 %v1052, %v1212
      %v1214 = vpop.f32.mrb[0].mxu0
      %1215 = vmatprep.mubr.bf16.mxu0 %v689
      %1216 = vmatmul.mubr.bf16.gmra.mrb[0].mxu0 %v688
      %v1217 = vpop.f32.mrb[0].mxu0
      %v1218 = vadd.f32 %v1057, %v1217
      %v1219 = vpop.f32.mrb[0].mxu0
      %v1220 = vpop.f32.mrb[0].mxu0
      %v1221 = vadd.f32 %v1060, %v1220
      %v1222 = vpop.f32.mrb[0].mxu0
      %1223 = vmatprep.mubr.bf16.mxu0 %v693
      %1224 = vmatmul.mubr.bf16.gmra.mrb[0].mxu0 %v692
      %v1225 = vpop.f32.mrb[0].mxu0
      %v1226 = vadd.f32 %v1065, %v1225
      %v1227 = vpop.f32.mrb[0].mxu0
      %v1228 = vpop.f32.mrb[0].mxu0
      %v1229 = vadd.f32 %v1068, %v1228
      %v1230 = vpop.f32.mrb[0].mxu0
      %1231 = vmatprep.mubr.bf16.mxu0 %v697
      %1232 = vmatmul.mubr.bf16.gmra.mrb[0].mxu0 %v696
      %v1233 = vpop.f32.mrb[0].mxu0
      %v1234 = vadd.f32 %v1073, %v1233
      %v1235 = vpop.f32.mrb[0].mxu0
      %v1236 = vpop.f32.mrb[0].mxu0
      %v1237 = vadd.f32 %v1076, %v1236
      %v1238 = vpop.f32.mrb[0].mxu0
      %1239 = vmatprep.mubr.bf16.mxu0 %v701
      %1240 = vmatmul.mubr.bf16.gmra.mrb[0].mxu0 %v700
      %v1241 = vpop.f32.mrb[0].mxu0
      %v1242 = vadd.f32 %v1081, %v1241
      %v1243 = vpop.f32.mrb[0].mxu0
      %v1244 = vpop.f32.mrb[0].mxu0
      %v1245 = vadd.f32 %v1084, %v1244
      %v1246 = vpop.f32.mrb[0].mxu0
      %1247 = vmatprep.mubr.bf16.mxu0 %v705
      %1248 = vmatmul.mubr.bf16.gmra.mrb[0].mxu0 %v704
      %v1249 = vpop.f32.mrb[0].mxu0
      %v1250 = vadd.f32 %v1089, %v1249
      %v1251 = vpop.f32.mrb[0].mxu0
      %v1252 = vpop.f32.mrb[0].mxu0
      %v1253 = vadd.f32 %v1092, %v1252
      %v1254 = vpop.f32.mrb[0].mxu0
      %1255 = vmatprep.mubr.bf16.mxu0 %v709
      %1256 = vmatmul.mubr.bf16.gmra.mrb[0].mxu0 %v708
      %v1257 = vpop.f32.mrb[0].mxu0
      %v1258 = vadd.f32 %v1097, %v1257
      %v1259 = vpop.f32.mrb[0].mxu0
      %v1260 = vpop.f32.mrb[0].mxu0
      %v1261 = vadd.f32 %v1100, %v1260
      %v1262 = vpop.f32.mrb[0].mxu0
      %1263 = vmatprep.mubr.bf16.mxu0 %v713
      %1264 = vmatmul.mubr.bf16.gmra.mrb[0].mxu0 %v712
      %v1265 = vpop.f32.mrb[0].mxu0
      %v1266 = vadd.f32 %v1105, %v1265
      %v1267 = vpop.f32.mrb[0].mxu0
      %v1268 = vpop.f32.mrb[0].mxu0
      %v1269 = vadd.f32 %v1108, %v1268
      %v1270 = vpop.f32.mrb[0].mxu0
      %1271 = vmatprep.mubr.bf16.mxu0 %v717
      %1272 = vmatmul.mubr.bf16.gmra.mrb[0].mxu0 %v716
      %v1273 = vpop.f32.mrb[0].mxu0
      %v1274 = vadd.f32 %v1113, %v1273
      %v1275 = vpop.f32.mrb[0].mxu0
      %v1276 = vpop.f32.mrb[0].mxu0
      %v1277 = vadd.f32 %v1116, %v1276
      %v1278 = vpop.f32.mrb[0].mxu0
      %1279 = vmatprep.mubr.bf16.mxu0 %v721
      %1280 = vmatmul.mubr.bf16.gmra.mrb[0].mxu0 %v720
      %v1281 = vpop.f32.mrb[0].mxu0
      %v1282 = vadd.f32 %v1121, %v1281
      %v1283 = vpop.f32.mrb[0].mxu0
      %v1284 = vpop.f32.mrb[0].mxu0
      %v1285 = vadd.f32 %v1124, %v1284
      %v1286 = vpop.f32.mrb[0].mxu0
      %1287 = vmatprep.mubr.bf16.mxu0 %v725
      %1288 = vmatmul.mubr.bf16.gmra.mrb[0].mxu0 %v724
      %v1289 = vpop.f32.mrb[0].mxu0
      %v1290 = vadd.f32 %v1129, %v1289
      %v1291 = vpop.f32.mrb[0].mxu0
      %v1292 = vpop.f32.mrb[0].mxu0
      %v1293 = vadd.f32 %v1132, %v1292
      %v1294 = vpop.f32.mrb[0].mxu0
      %1295 = vmatprep.mubr.bf16.mxu0 %v729
      %1296 = vmatmul.mubr.bf16.gmra.mrb[0].mxu0 %v728
      %v1297 = vpop.f32.mrb[0].mxu0
      %v1298 = vadd.f32 %v1137, %v1297
      %v1299 = vpop.f32.mrb[0].mxu0
      %v1300 = vpop.f32.mrb[0].mxu0
      %v1301 = vadd.f32 %v1140, %v1300
      %v1302 = vpop.f32.mrb[0].mxu0
      %1303 = vmatprep.mubr.bf16.mxu0 %v733
      %1304 = vmatmul.mubr.bf16.gmra.mrb[0].mxu0 %v732
      %v1305 = vpop.f32.mrb[0].mxu0
      %v1306 = vadd.f32 %v1145, %v1305
      %v1307 = vpop.f32.mrb[0].mxu0
      %v1308 = vpop.f32.mrb[0].mxu0
      %v1309 = vadd.f32 %v1148, %v1308
      %v1310 = vpop.f32.mrb[0].mxu0
      %1311 = vdwg.mxu0
      %v1312 = vadd.f32 %v382, %v1186
      %v1313 = vadd.f32 %v383, %v1189
      %v1314 = vadd.f32 %v384, %v1194
      %v1315 = vadd.f32 %v385, %v1197
      %v1316 = vadd.f32 %v386, %v1202
      %v1317 = vadd.f32 %v387, %v1205
      %v1318 = vadd.f32 %v388, %v1210
      %v1319 = vadd.f32 %v389, %v1213
      %v1320 = vadd.f32 %v390, %v1218
      %v1321 = vadd.f32 %v391, %v1221
      %v1322 = vadd.f32 %v392, %v1226
      %v1323 = vadd.f32 %v393, %v1229
      %v1324 = vadd.f32 %v394, %v1234
      %v1325 = vadd.f32 %v395, %v1237
      %v1326 = vadd.f32 %v396, %v1242
      %v1327 = vadd.f32 %v397, %v1245
      %v1328 = vadd.f32 %v398, %v1250
      %v1329 = vadd.f32 %v399, %v1253
      %v1330 = vadd.f32 %v400, %v1258
      %v1331 = vadd.f32 %v401, %v1261
      %v1332 = vadd.f32 %v402, %v1266
      %v1333 = vadd.f32 %v403, %v1269
      %v1334 = vadd.f32 %v404, %v1274
      %v1335 = vadd.f32 %v405, %v1277
      %v1336 = vadd.f32 %v406, %v1282
      %v1337 = vadd.f32 %v407, %v1285
      %v1338 = vadd.f32 %v408, %v1290
      %v1339 = vadd.f32 %v409, %v1293
      %v1340 = vadd.f32 %v410, %v1298
      %v1341 = vadd.f32 %v411, %v1301
      %v1342 = vadd.f32 %v412, %v1306
      %v1343 = vadd.f32 %v413, %v1309
      %1344 = vst [vmem:[#allocation2] sm:$0xff] %v1312
      %1345 = vst [vmem:[#allocation2 + $0x8] sm:$0xff] %v1313
      %1346 = vst [vmem:[#allocation2 + $0x10] sm:$0xff] %v1314
      %1347 = vst [vmem:[#allocation2 + $0x18] sm:$0xff] %v1315
      %1348 = vst [vmem:[#allocation2 + $0x20] sm:$0xff] %v1316
      %1349 = vst [vmem:[#allocation2 + $0x28] sm:$0xff] %v1317
      %1350 = vst [vmem:[#allocation2 + $0x30] sm:$0xff] %v1318
      %1351 = vst [vmem:[#allocation2 + $0x38] sm:$0xff] %v1319
      %1352 = vst [vmem:[#allocation2 + $0x40] sm:$0xff] %v1320
      %1353 = vst [vmem:[#allocation2 + $0x48] sm:$0xff] %v1321
      %1354 = vst [vmem:[#allocation2 + $0x50] sm:$0xff] %v1322
      %1355 = vst [vmem:[#allocation2 + $0x58] sm:$0xff] %v1323
      %1356 = vst [vmem:[#allocation2 + $0x60] sm:$0xff] %v1324
      %1357 = vst [vmem:[#allocation2 + $0x68] sm:$0xff] %v1325
      %1358 = vst [vmem:[#allocation2 + $0x70] sm:$0xff] %v1326
      %1359 = vst [vmem:[#allocation2 + $0x78] sm:$0xff] %v1327
      %1360 = vst [vmem:[#allocation2 + $0x80] sm:$0xff] %v1328
      %1361 = vst [vmem:[#allocation2 + $0x88] sm:$0xff] %v1329
      %1362 = vst [vmem:[#allocation2 + $0x90] sm:$0xff] %v1330
      %1363 = vst [vmem:[#allocation2 + $0x98] sm:$0xff] %v1331
      %1364 = vst [vmem:[#allocation2 + $0xa0] sm:$0xff] %v1332
      %1365 = vst [vmem:[#allocation2 + $0xa8] sm:$0xff] %v1333
      %1366 = vst [vmem:[#allocation2 + $0xb0] sm:$0xff] %v1334
      %1367 = vst [vmem:[#allocation2 + $0xb8] sm:$0xff] %v1335
      %1368 = vst [vmem:[#allocation2 + $0xc0] sm:$0xff] %v1336
      %1369 = vst [vmem:[#allocation2 + $0xc8] sm:$0xff] %v1337
      %1370 = vst [vmem:[#allocation2 + $0xd0] sm:$0xff] %v1338
      %1371 = vst [vmem:[#allocation2 + $0xd8] sm:$0xff] %v1339
      %1372 = vst [vmem:[#allocation2 + $0xe0] sm:$0xff] %v1340
      %1373 = vst [vmem:[#allocation2 + $0xe8] sm:$0xff] %v1341
      %1374 = vst [vmem:[#allocation2 + $0xf0] sm:$0xff] %v1342
      %1375 = vst [vmem:[#allocation2 + $0xf8] sm:$0xff] %v1343
      // Predicated region
      $region41: #{_graphsage_forward.3} parent=35 // pred_check
        %p1376 = pneg %p277
      $region42: #{_graphsage_forward.3} parent=35 // pred_check_branch
        %1378 = sbr.rel (%p1376) target = $region44
      $region43: #{_graphsage_forward.3} parent=35 // pred_region
        %v1379 = vld [vmem:[%s262] sm:$0xff]
        %v1380 = vld [vmem:[%s262 + $0x8] sm:$0xff]
        %v1381 = vld [vmem:[%s262 + $0x10] sm:$0xff]
        %v1382 = vld [vmem:[%s262 + $0x18] sm:$0xff]
        %v1383 = vld [vmem:[%s262 + $0x20] sm:$0xff]
        %v1384 = vld [vmem:[%s262 + $0x28] sm:$0xff]
        %v1385 = vld [vmem:[%s262 + $0x30] sm:$0xff]
        %v1386 = vld [vmem:[%s262 + $0x38] sm:$0xff]
        %v1387 = vld [vmem:[%s262 + $0x40] sm:$0xff]
        %v1388 = vld [vmem:[%s262 + $0x48] sm:$0xff]
        %v1389 = vld [vmem:[%s262 + $0x50] sm:$0xff]
        %v1390 = vld [vmem:[%s262 + $0x58] sm:$0xff]
        %v1391 = vld [vmem:[%s262 + $0x60] sm:$0xff]
        %v1392 = vld [vmem:[%s262 + $0x68] sm:$0xff]
        %v1393 = vld [vmem:[%s262 + $0x70] sm:$0xff]
        %v1394 = vld [vmem:[%s262 + $0x78] sm:$0xff]
        %v1395 = vld [vmem:[%s262 + $0x80] sm:$0xff]
        %v1396 = vld [vmem:[%s262 + $0x88] sm:$0xff]
        %v1397 = vld [vmem:[%s262 + $0x90] sm:$0xff]
        %v1398 = vld [vmem:[%s262 + $0x98] sm:$0xff]
        %v1399 = vld [vmem:[%s262 + $0xa0] sm:$0xff]
        %v1400 = vld [vmem:[%s262 + $0xa8] sm:$0xff]
        %v1401 = vld [vmem:[%s262 + $0xb0] sm:$0xff]
        %v1402 = vld [vmem:[%s262 + $0xb8] sm:$0xff]
        %v1403 = vld [vmem:[%s262 + $0xc0] sm:$0xff]
        %v1404 = vld [vmem:[%s262 + $0xc8] sm:$0xff]
        %v1405 = vld [vmem:[%s262 + $0xd0] sm:$0xff]
        %v1406 = vld [vmem:[%s262 + $0xd8] sm:$0xff]
        %v1407 = vld [vmem:[%s262 + $0xe0] sm:$0xff]
        %v1408 = vld [vmem:[%s262 + $0xe8] sm:$0xff]
        %v1409 = vld [vmem:[%s262 + $0xf0] sm:$0xff]
        %v1410 = vld [vmem:[%s262 + $0xf8] sm:$0xff]
        %v1411 = vld [vmem:[%s268] sm:$0xff]
        %v1412 = vld [vmem:[%s268 + $0x8] sm:$0xff]
        %v1413 = vld [vmem:[%s268 + $0x10] sm:$0xff]
        %v1414 = vld [vmem:[%s268 + $0x18] sm:$0xff]
        %v1415 = vld [vmem:[%s268 + $0x20] sm:$0xff]
        %v1416 = vld [vmem:[%s268 + $0x28] sm:$0xff]
        %v1417 = vld [vmem:[%s268 + $0x30] sm:$0xff]
        %v1418 = vld [vmem:[%s268 + $0x38] sm:$0xff]
        %v1419 = vld [vmem:[%s268 + $0x40] sm:$0xff]
        %v1420 = vld [vmem:[%s268 + $0x48] sm:$0xff]
        %v1421 = vld [vmem:[%s268 + $0x50] sm:$0xff]
        %v1422 = vld [vmem:[%s268 + $0x58] sm:$0xff]
        %v1423 = vld [vmem:[%s268 + $0x60] sm:$0xff]
        %v1424 = vld [vmem:[%s268 + $0x68] sm:$0xff]
        %v1425 = vld [vmem:[%s268 + $0x70] sm:$0xff]
        %v1426 = vld [vmem:[%s268 + $0x78] sm:$0xff]
        %v1427 = vld [vmem:[%s268 + $0x80] sm:$0xff]
        %v1428 = vld [vmem:[%s268 + $0x88] sm:$0xff]
        %v1429 = vld [vmem:[%s268 + $0x90] sm:$0xff]
        %v1430 = vld [vmem:[%s268 + $0x98] sm:$0xff]
        %v1431 = vld [vmem:[%s268 + $0xa0] sm:$0xff]
        %v1432 = vld [vmem:[%s268 + $0xa8] sm:$0xff]
        %v1433 = vld [vmem:[%s268 + $0xb0] sm:$0xff]
        %v1434 = vld [vmem:[%s268 + $0xb8] sm:$0xff]
        %v1435 = vld [vmem:[%s268 + $0xc0] sm:$0xff]
        %v1436 = vld [vmem:[%s268 + $0xc8] sm:$0xff]
        %v1437 = vld [vmem:[%s268 + $0xd0] sm:$0xff]
        %v1438 = vld [vmem:[%s268 + $0xd8] sm:$0xff]
        %v1439 = vld [vmem:[%s268 + $0xe0] sm:$0xff]
        %v1440 = vld [vmem:[%s268 + $0xe8] sm:$0xff]
        %v1441 = vld [vmem:[%s268 + $0xf0] sm:$0xff]
        %v1442 = vld [vmem:[%s268 + $0xf8] sm:$0xff]
        %v1443 = vld [vmem:[#allocation2] sm:$0xff]
        %v1444 = vld [vmem:[#allocation2 + $0x8] sm:$0xff]
        %v1445 = vld [vmem:[#allocation2 + $0x10] sm:$0xff]
        %v1446 = vld [vmem:[#allocation2 + $0x18] sm:$0xff]
        %v1447 = vld [vmem:[#allocation2 + $0x20] sm:$0xff]
        %v1448 = vld [vmem:[#allocation2 + $0x28] sm:$0xff]
        %v1449 = vld [vmem:[#allocation2 + $0x30] sm:$0xff]
        %v1450 = vld [vmem:[#allocation2 + $0x38] sm:$0xff]
        %v1451 = vld [vmem:[#allocation2 + $0x40] sm:$0xff]
        %v1452 = vld [vmem:[#allocation2 + $0x48] sm:$0xff]
        %v1453 = vld [vmem:[#allocation2 + $0x50] sm:$0xff]
        %v1454 = vld [vmem:[#allocation2 + $0x58] sm:$0xff]
        %v1455 = vld [vmem:[#allocation2 + $0x60] sm:$0xff]
        %v1456 = vld [vmem:[#allocation2 + $0x68] sm:$0xff]
        %v1457 = vld [vmem:[#allocation2 + $0x70] sm:$0xff]
        %v1458 = vld [vmem:[#allocation2 + $0x78] sm:$0xff]
        %v1459 = vld [vmem:[#allocation2 + $0x80] sm:$0xff]
        %v1460 = vld [vmem:[#allocation2 + $0x88] sm:$0xff]
        %v1461 = vld [vmem:[#allocation2 + $0x90] sm:$0xff]
        %v1462 = vld [vmem:[#allocation2 + $0x98] sm:$0xff]
        %v1463 = vld [vmem:[#allocation2 + $0xa0] sm:$0xff]
        %v1464 = vld [vmem:[#allocation2 + $0xa8] sm:$0xff]
        %v1465 = vld [vmem:[#allocation2 + $0xb0] sm:$0xff]
        %v1466 = vld [vmem:[#allocation2 + $0xb8] sm:$0xff]
        %v1467 = vld [vmem:[#allocation2 + $0xc0] sm:$0xff]
        %v1468 = vld [vmem:[#allocation2 + $0xc8] sm:$0xff]
        %v1469 = vld [vmem:[#allocation2 + $0xd0] sm:$0xff]
        %v1470 = vld [vmem:[#allocation2 + $0xd8] sm:$0xff]
        %v1471 = vld [vmem:[#allocation2 + $0xe0] sm:$0xff]
        %v1472 = vld [vmem:[#allocation2 + $0xe8] sm:$0xff]
        %v1473 = vld [vmem:[#allocation2 + $0xf0] sm:$0xff]
        %v1474 = vld [vmem:[#allocation2 + $0xf8] sm:$0xff]
        %1476 = vset.pattern.permute.xlu0 0
        %1477 = vperm.xlu0 %1476, %v1411
        %v1478 = vpop.permute.xlu0 %1477
        %1481 = vset.pattern.permute.xlu0 0
        %1482 = vperm.xlu0 %1481, %v1412
        %v1483 = vpop.permute.xlu0 %1482
        %1486 = vset.pattern.permute.xlu0 0
        %1487 = vperm.xlu0 %1486, %v1413
        %v1488 = vpop.permute.xlu0 %1487
        %1491 = vset.pattern.permute.xlu0 0
        %1492 = vperm.xlu0 %1491, %v1414
        %v1493 = vpop.permute.xlu0 %1492
        %1496 = vset.pattern.permute.xlu0 0
        %1497 = vperm.xlu0 %1496, %v1415
        %v1498 = vpop.permute.xlu0 %1497
        %1501 = vset.pattern.permute.xlu0 0
        %1502 = vperm.xlu0 %1501, %v1416
        %v1503 = vpop.permute.xlu0 %1502
        %1506 = vset.pattern.permute.xlu0 0
        %1507 = vperm.xlu0 %1506, %v1417
        %v1508 = vpop.permute.xlu0 %1507
        %1511 = vset.pattern.permute.xlu0 0
        %1512 = vperm.xlu0 %1511, %v1418
        %v1513 = vpop.permute.xlu0 %1512
        %1516 = vset.pattern.permute.xlu0 0
        %1517 = vperm.xlu0 %1516, %v1419
        %v1518 = vpop.permute.xlu0 %1517
        %1521 = vset.pattern.permute.xlu0 0
        %1522 = vperm.xlu0 %1521, %v1420
        %v1523 = vpop.permute.xlu0 %1522
        %1526 = vset.pattern.permute.xlu0 0
        %1527 = vperm.xlu0 %1526, %v1421
        %v1528 = vpop.permute.xlu0 %1527
        %1531 = vset.pattern.permute.xlu0 0
        %1532 = vperm.xlu0 %1531, %v1422
        %v1533 = vpop.permute.xlu0 %1532
        %1536 = vset.pattern.permute.xlu0 0
        %1537 = vperm.xlu0 %1536, %v1423
        %v1538 = vpop.permute.xlu0 %1537
        %1541 = vset.pattern.permute.xlu0 0
        %1542 = vperm.xlu0 %1541, %v1424
        %v1543 = vpop.permute.xlu0 %1542
        %1546 = vset.pattern.permute.xlu0 0
        %1547 = vperm.xlu0 %1546, %v1425
        %v1548 = vpop.permute.xlu0 %1547
        %1551 = vset.pattern.permute.xlu0 0
        %1552 = vperm.xlu0 %1551, %v1426
        %v1553 = vpop.permute.xlu0 %1552
        %1556 = vset.pattern.permute.xlu0 0
        %1557 = vperm.xlu0 %1556, %v1427
        %v1558 = vpop.permute.xlu0 %1557
        %1561 = vset.pattern.permute.xlu0 0
        %1562 = vperm.xlu0 %1561, %v1428
        %v1563 = vpop.permute.xlu0 %1562
        %1566 = vset.pattern.permute.xlu0 0
        %1567 = vperm.xlu0 %1566, %v1429
        %v1568 = vpop.permute.xlu0 %1567
        %1571 = vset.pattern.permute.xlu0 0
        %1572 = vperm.xlu0 %1571, %v1430
        %v1573 = vpop.permute.xlu0 %1572
        %1576 = vset.pattern.permute.xlu0 0
        %1577 = vperm.xlu0 %1576, %v1431
        %v1578 = vpop.permute.xlu0 %1577
        %1581 = vset.pattern.permute.xlu0 0
        %1582 = vperm.xlu0 %1581, %v1432
        %v1583 = vpop.permute.xlu0 %1582
        %1586 = vset.pattern.permute.xlu0 0
        %1587 = vperm.xlu0 %1586, %v1433
        %v1588 = vpop.permute.xlu0 %1587
        %1591 = vset.pattern.permute.xlu0 0
        %1592 = vperm.xlu0 %1591, %v1434
        %v1593 = vpop.permute.xlu0 %1592
        %1596 = vset.pattern.permute.xlu0 0
        %1597 = vperm.xlu0 %1596, %v1435
        %v1598 = vpop.permute.xlu0 %1597
        %1601 = vset.pattern.permute.xlu0 0
        %1602 = vperm.xlu0 %1601, %v1436
        %v1603 = vpop.permute.xlu0 %1602
        %1606 = vset.pattern.permute.xlu0 0
        %1607 = vperm.xlu0 %1606, %v1437
        %v1608 = vpop.permute.xlu0 %1607
        %1611 = vset.pattern.permute.xlu0 0
        %1612 = vperm.xlu0 %1611, %v1438
        %v1613 = vpop.permute.xlu0 %1612
        %1616 = vset.pattern.permute.xlu0 0
        %1617 = vperm.xlu0 %1616, %v1439
        %v1618 = vpop.permute.xlu0 %1617
        %1621 = vset.pattern.permute.xlu0 0
        %1622 = vperm.xlu0 %1621, %v1440
        %v1623 = vpop.permute.xlu0 %1622
        %1626 = vset.pattern.permute.xlu0 0
        %1627 = vperm.xlu0 %1626, %v1441
        %v1628 = vpop.permute.xlu0 %1627
        %1631 = vset.pattern.permute.xlu0 0
        %1632 = vperm.xlu0 %1631, %v1442
        %v1633 = vpop.permute.xlu0 %1632
        %v1635 = vmul.f32 %v1478, %v1443
        %v1636 = vmul.f32 %v1483, %v1444
        %v1637 = vmul.f32 %v1488, %v1445
        %v1638 = vmul.f32 %v1493, %v1446
        %v1639 = vmul.f32 %v1498, %v1447
        %v1640 = vmul.f32 %v1503, %v1448
        %v1641 = vmul.f32 %v1508, %v1449
        %v1642 = vmul.f32 %v1513, %v1450
        %v1643 = vmul.f32 %v1518, %v1451
        %v1644 = vmul.f32 %v1523, %v1452
        %v1645 = vmul.f32 %v1528, %v1453
        %v1646 = vmul.f32 %v1533, %v1454
        %v1647 = vmul.f32 %v1538, %v1455
        %v1648 = vmul.f32 %v1543, %v1456
        %v1649 = vmul.f32 %v1548, %v1457
        %v1650 = vmul.f32 %v1553, %v1458
        %v1651 = vmul.f32 %v1558, %v1459
        %v1652 = vmul.f32 %v1563, %v1460
        %v1653 = vmul.f32 %v1568, %v1461
        %v1654 = vmul.f32 %v1573, %v1462
        %v1655 = vmul.f32 %v1578, %v1463
        %v1656 = vmul.f32 %v1583, %v1464
        %v1657 = vmul.f32 %v1588, %v1465
        %v1658 = vmul.f32 %v1593, %v1466
        %v1659 = vmul.f32 %v1598, %v1467
        %v1660 = vmul.f32 %v1603, %v1468
        %v1661 = vmul.f32 %v1608, %v1469
        %v1662 = vmul.f32 %v1613, %v1470
        %v1663 = vmul.f32 %v1618, %v1471
        %v1664 = vmul.f32 %v1623, %v1472
        %v1665 = vmul.f32 %v1628, %v1473
        %v1666 = vmul.f32 %v1633, %v1474
        %v1667 = vadd.f32 %v1379, %v1635
        %v1668 = vadd.f32 %v1380, %v1636
        %v1669 = vadd.f32 %v1381, %v1637
        %v1670 = vadd.f32 %v1382, %v1638
        %v1671 = vadd.f32 %v1383, %v1639
        %v1672 = vadd.f32 %v1384, %v1640
        %v1673 = vadd.f32 %v1385, %v1641
        %v1674 = vadd.f32 %v1386, %v1642
        %v1675 = vadd.f32 %v1387, %v1643
        %v1676 = vadd.f32 %v1388, %v1644
        %v1677 = vadd.f32 %v1389, %v1645
        %v1678 = vadd.f32 %v1390, %v1646
        %v1679 = vadd.f32 %v1391, %v1647
        %v1680 = vadd.f32 %v1392, %v1648
        %v1681 = vadd.f32 %v1393, %v1649
        %v1682 = vadd.f32 %v1394, %v1650
        %v1683 = vadd.f32 %v1395, %v1651
        %v1684 = vadd.f32 %v1396, %v1652
        %v1685 = vadd.f32 %v1397, %v1653
        %v1686 = vadd.f32 %v1398, %v1654
        %v1687 = vadd.f32 %v1399, %v1655
        %v1688 = vadd.f32 %v1400, %v1656
        %v1689 = vadd.f32 %v1401, %v1657
        %v1690 = vadd.f32 %v1402, %v1658
        %v1691 = vadd.f32 %v1403, %v1659
        %v1692 = vadd.f32 %v1404, %v1660
        %v1693 = vadd.f32 %v1405, %v1661
        %v1694 = vadd.f32 %v1406, %v1662
        %v1695 = vadd.f32 %v1407, %v1663
        %v1696 = vadd.f32 %v1408, %v1664
        %v1697 = vadd.f32 %v1409, %v1665
        %v1698 = vadd.f32 %v1410, %v1666
        %v1699 = vmax.f32 %v1667, 0.0
        %v1700 = vmax.f32 %v1668, 0.0
        %v1701 = vmax.f32 %v1669, 0.0
        %v1702 = vmax.f32 %v1670, 0.0
        %v1703 = vmax.f32 %v1671, 0.0
        %v1704 = vmax.f32 %v1672, 0.0
        %v1705 = vmax.f32 %v1673, 0.0
        %v1706 = vmax.f32 %v1674, 0.0
        %v1707 = vmax.f32 %v1675, 0.0
        %v1708 = vmax.f32 %v1676, 0.0
        %v1709 = vmax.f32 %v1677, 0.0
        %v1710 = vmax.f32 %v1678, 0.0
        %v1711 = vmax.f32 %v1679, 0.0
        %v1712 = vmax.f32 %v1680, 0.0
        %v1713 = vmax.f32 %v1681, 0.0
        %v1714 = vmax.f32 %v1682, 0.0
        %v1715 = vmax.f32 %v1683, 0.0
        %v1716 = vmax.f32 %v1684, 0.0
        %v1717 = vmax.f32 %v1685, 0.0
        %v1718 = vmax.f32 %v1686, 0.0
        %v1719 = vmax.f32 %v1687, 0.0
        %v1720 = vmax.f32 %v1688, 0.0
        %v1721 = vmax.f32 %v1689, 0.0
        %v1722 = vmax.f32 %v1690, 0.0
        %v1723 = vmax.f32 %v1691, 0.0
        %v1724 = vmax.f32 %v1692, 0.0
        %v1725 = vmax.f32 %v1693, 0.0
        %v1726 = vmax.f32 %v1694, 0.0
        %v1727 = vmax.f32 %v1695, 0.0
        %v1728 = vmax.f32 %v1696, 0.0
        %v1729 = vmax.f32 %v1697, 0.0
        %v1730 = vmax.f32 %v1698, 0.0
        %1731 = vst [vmem:[%s274] sm:$0xff] %v1699
        %1732 = vst [vmem:[%s274 + $0x8] sm:$0xff] %v1700
        %1733 = vst [vmem:[%s274 + $0x10] sm:$0xff] %v1701
        %1734 = vst [vmem:[%s274 + $0x18] sm:$0xff] %v1702
        %1735 = vst [vmem:[%s274 + $0x20] sm:$0xff] %v1703
        %1736 = vst [vmem:[%s274 + $0x28] sm:$0xff] %v1704
        %1737 = vst [vmem:[%s274 + $0x30] sm:$0xff] %v1705
        %1738 = vst [vmem:[%s274 + $0x38] sm:$0xff] %v1706
        %1739 = vst [vmem:[%s274 + $0x40] sm:$0xff] %v1707
        %1740 = vst [vmem:[%s274 + $0x48] sm:$0xff] %v1708
        %1741 = vst [vmem:[%s274 + $0x50] sm:$0xff] %v1709
        %1742 = vst [vmem:[%s274 + $0x58] sm:$0xff] %v1710
        %1743 = vst [vmem:[%s274 + $0x60] sm:$0xff] %v1711
        %1744 = vst [vmem:[%s274 + $0x68] sm:$0xff] %v1712
        %1745 = vst [vmem:[%s274 + $0x70] sm:$0xff] %v1713
        %1746 = vst [vmem:[%s274 + $0x78] sm:$0xff] %v1714
        %1747 = vst [vmem:[%s274 + $0x80] sm:$0xff] %v1715
        %1748 = vst [vmem:[%s274 + $0x88] sm:$0xff] %v1716
        %1749 = vst [vmem:[%s274 + $0x90] sm:$0xff] %v1717
        %1750 = vst [vmem:[%s274 + $0x98] sm:$0xff] %v1718
        %1751 = vst [vmem:[%s274 + $0xa0] sm:$0xff] %v1719
        %1752 = vst [vmem:[%s274 + $0xa8] sm:$0xff] %v1720
        %1753 = vst [vmem:[%s274 + $0xb0] sm:$0xff] %v1721
        %1754 = vst [vmem:[%s274 + $0xb8] sm:$0xff] %v1722
        %1755 = vst [vmem:[%s274 + $0xc0] sm:$0xff] %v1723
        %1756 = vst [vmem:[%s274 + $0xc8] sm:$0xff] %v1724
        %1757 = vst [vmem:[%s274 + $0xd0] sm:$0xff] %v1725
        %1758 = vst [vmem:[%s274 + $0xd8] sm:$0xff] %v1726
        %1759 = vst [vmem:[%s274 + $0xe0] sm:$0xff] %v1727
        %1760 = vst [vmem:[%s274 + $0xe8] sm:$0xff] %v1728
        %1761 = vst [vmem:[%s274 + $0xf0] sm:$0xff] %v1729
        %1762 = vst [vmem:[%s274 + $0xf8] sm:$0xff] %v1730
      $region44: #{_graphsage_forward.3} parent=35 // pred_fallthru
        _
      %s1763 = smul.u32 32, %s19
      %p1764 = scmp.lt.s32.totalorder %s1763, 63
      %s1765 = scalar_select %p1764, %s1763, 63
      %s1766 = smul.addr %s1765, 8
      %s1767 = scalar_lea.vmem %s4, %s1766
      // Predicated region
      $region45: #{_graphsage_forward.3} parent=35 // pred_check
        %p1768 = pneg %p146
      $region46: #{_graphsage_forward.3} parent=35 // pred_check_branch
        %1770 = sbr.rel (%p1768) target = $region48
      $region47: #{_graphsage_forward.3} parent=35 // pred_region
        %s1771 = smul.u32 32, %s19
      $region48: #{_graphsage_forward.3} parent=35 // pred_fallthru
        _
    $region36: #{_graphsage_forward.3} parent=5 // pred_fallthru
      _
    %p1772 = scmp.le.s32.totalorder 2, %s10
    // Predicated region
    $region49: #{_graphsage_forward.3} parent=5 // pred_check
      %p1773 = pneg %p1772
    $region50: #{_graphsage_forward.3} parent=5 // pred_check_branch
      %1775 = sbr.rel (%p1773) target = $region52
    $region51: #{_graphsage_forward.3} parent=5 // pred_region
      %s1776 = ssub.s32 %s10, 2
      // Predicated region
      $region53: #{_graphsage_forward.3} parent=51 // pred_check
        %p1777 = pneg %p152
      $region54: #{_graphsage_forward.3} parent=51 // pred_check_branch
        %1779 = sbr.rel (%p1777) target = $region56
      $region55: #{_graphsage_forward.3} parent=51 // pred_region
        %s1780 = smul.u32 32, %s21
        %p1781 = scmp.lt.s32.totalorder %s1780, 63
        %s1782 = scalar_select %p1781, %s1780, 63
        %s1783 = smul.addr %s1782, 8
        %s1784 = scalar_lea.vmem %s4, %s1783
      $region56: #{_graphsage_forward.3} parent=51 // pred_fallthru
        _
    $region52: #{_graphsage_forward.3} parent=5 // pred_fallthru
      _
  $region6: #{_graphsage_forward.3} parent=0 // loop_footer
    %s14 = sadd.s32 1, %s10
  $region7: #{_graphsage_forward.3} parent=0 // loop_footer_branch
    %9 = sbr.rel target = $region3
  $region8: #{_graphsage_forward.3} parent=0 // loop_exit
    _

</llo_original>
